<compile_context>
chip_gen: v5e
topology: v5e:2x2
jax: 0.10.0
libtpu: 0.0.40
codegen_flags: <defaults>
</compile_context>

<pallas_src>
import math
import functools

import numpy as np
import jax
import jax.numpy as jnp
from jax import lax
from jax.experimental import pallas as pl
from jax.experimental.pallas import tpu as pltpu


# ----------------------------- config (small) -------------------------------
N_TOKEN = 32
D_MODEL = 32
N_HEAD = 2
D_HEAD = 16           # n_head * d_head == d_model
D_INNER = 64
N_LAYER = 2
DROPOUT = 0.1         # eval mode -> identity   # TODO(synk): training-mode dropout not implemented
NOTE_VOCAB = 16
DURATION_VOCAB = 12
GAP_VOCAB = 8
HEAD_TOTAL = NOTE_VOCAB + DURATION_VOCAB + GAP_VOCAB   # 36
SLAB_W = 128                                            # lane-dense slab width
HEAD_PAD = SLAB_W

BATCH = 2
SEQ = 8

LN_EPS = 1e-5
F_ROWS_PER_LAYER = 8   # rows per layer in the f32 slab (rwb,rrb,ln1g,ln1b,bff1,bff2,ln2g,ln2b)


# ----------------------------- small helpers --------------------------------
def sinusoid_pos_emb(seq_len, d_model):
    # Transformer-XL: pos_seq = [seq_len-1, ..., 0]   (numpy -> compile-time const)
    pos_seq = np.arange(seq_len - 1, -1, -1, dtype=np.float32)
    inv_freq = 1.0 / (10000.0 ** (np.arange(0, d_model, 2, dtype=np.float32) / d_model))
    sinusoid = pos_seq[:, None] * inv_freq[None, :]
    return np.concatenate([np.sin(sinusoid), np.cos(sinusoid)], axis=-1)  # (S, D)


def _layer_norm(x, g, b):
    mu = jnp.mean(x, axis=-1, keepdims=True)
    var = jnp.mean((x - mu) ** 2, axis=-1, keepdims=True)
    return (x - mu) * lax.rsqrt(var + LN_EPS) * g + b


def _roll_right(x, t, size):
    # out[:, j] = x[:, (j - t) % size]  (static slice + concat; t, size are Python ints)
    if t == 0:
        return x
    return jnp.concatenate([x[:, size - t:], x[:, :size - t]], axis=1)


# ----------------------------- fused Pallas kernel ---------------------------
def _fused_forward_kernel(x_ref, w_ref, f_ref, rk_ref, ms_ref, out_ref, *,
                          n_layer, n_head, d_head, d_model, d_inner, seq, batch, n_bits):
    bs = batch * seq
    hd = n_head * d_head
    scale = 1.0 / math.sqrt(d_head)
    bf16 = jnp.bfloat16

    # weight-slab row offsets (must match init_params packing)
    off_qkv = 0
    off_wo = d_model
    off_ff1 = d_model + hd
    off_ff2 = 2 * d_model + hd
    w_rows = 2 * d_model + hd + d_inner

    x = x_ref[...]                                   # (bs, D) f32, batch folded into rows
    fs = f_ref[...]                                  # (L*8+1, 128) f32 bias/LN slab
    ms = ms_ref[...]                                 # (bs, bs + n_bits) f32

    mask_bias = ms[:, 0:bs]                          # additive 0 / -1e30 mask (precomputed)
    shift_bits = [ms[:, bs + j:bs + j + 1] > 0.5 for j in range(n_bits)]   # (bs,1) bools

    for l in range(n_layer):
        wbase = l * w_rows
        fbase = l * F_ROWS_PER_LAYER
        x_bf = x.astype(bf16)

        # ---- fused Q|K|V projection: one lane-dense (bs, D) @ (D, 128) matmul ----
        qkv = jnp.dot(x_bf, w_ref[pl.ds(wbase + off_qkv, d_model), :],
                      preferred_element_type=jnp.float32)                  # (bs, 128)
        q_all = qkv[:, 0:hd]
        k_bf = qkv[:, hd:2 * hd].astype(bf16)
        v_bf = qkv[:, 2 * hd:3 * hd].astype(bf16)

        qu_all = (q_all + fs[fbase + 0:fbase + 1, 0:hd]).astype(bf16)      # + r_w_bias (u)
        qv_all = (q_all + fs[fbase + 1:fbase + 2, 0:hd]).astype(bf16)      # + r_r_bias (v)

        # ---- BD for all heads with ONE matmul against the block-diagonal
        #      precomputed rel-pos keys (rk = pos @ Wr, computed in the wrapper) ----
        bd_raw = jnp.dot(qv_all, rk_ref[l], preferred_element_type=jnp.float32)  # (bs, H*S)

        head_outs = []
        for h in range(n_head):
            qu_h = qu_all[:, h * d_head:(h + 1) * d_head]
            k_h = k_bf[:, h * d_head:(h + 1) * d_head]
            v_h = v_bf[:, h * d_head:(h + 1) * d_head]

            # AC[i,j] = (q_i + u) . k_j  (cross-batch / non-causal entries masked below)
            ac = lax.dot_general(qu_h, k_h, (((1,), (1,)), ((), ())),
                                 preferred_element_type=jnp.float32)       # (bs, bs)

            # rel_shift: BD[i, j] = BD_raw[i, (j - (local_i + 1)) mod S]
            # (== BD_raw[i, S-1-local_i+j] on all unmasked entries)
            # implemented as a log2(S)-stage barrel shifter with precomputed bits
            bd = bd_raw[:, h * seq:(h + 1) * seq]                          # (bs, S)
            for j, bit in enumerate(shift_bits):
                bd = jnp.where(bit, _roll_right(bd, 1 << j, seq), bd)
            bd_full = jnp.concatenate([bd] * batch, axis=1)                # (bs, bs)

            score = (ac + bd_full) * scale + mask_bias
            score = score - jnp.max(score, axis=-1, keepdims=True)
            p = jnp.exp(score)
            p = p * pl.reciprocal(jnp.sum(p, axis=-1, keepdims=True), approx=True)

            head_outs.append(jnp.dot(p.astype(bf16), v_h,
                                     preferred_element_type=jnp.float32))  # (bs, dh)

        # ---- output projection: heads concatenated, one (bs, HD) @ (HD, 128) matmul ----
        o_cat = jnp.concatenate(head_outs, axis=1).astype(bf16)
        attn_out = jnp.dot(o_cat, w_ref[pl.ds(wbase + off_wo, hd), :],
                           preferred_element_type=jnp.float32)[:, 0:d_model]

        # residual + post-LN (attention)   -- f32 elementwise (v5e-safe)
        x = _layer_norm(x + attn_out,
                        fs[fbase + 2:fbase + 3, 0:d_model],
                        fs[fbase + 3:fbase + 4, 0:d_model])

        # ---- position-wise FF + residual + post-LN ----
        ff = jnp.dot(x.astype(bf16), w_ref[pl.ds(wbase + off_ff1, d_model), :],
                     preferred_element_type=jnp.float32)[:, 0:d_inner]
        ff = jnp.maximum(ff + fs[fbase + 4:fbase + 5, 0:d_inner], 0.0)
        ff = jnp.dot(ff.astype(bf16), w_ref[pl.ds(wbase + off_ff2, d_inner), :],
                     preferred_element_type=jnp.float32)[:, 0:d_model]
        ff = ff + fs[fbase + 5:fbase + 6, 0:d_model]
        x = _layer_norm(x + ff,
                        fs[fbase + 6:fbase + 7, 0:d_model],
                        fs[fbase + 7:fbase + 8, 0:d_model])

    # ---- fused note|duration|gap heads: one lane-dense matmul, one unmasked store ----
    out_ref[...] = (jnp.dot(x.astype(bf16),
                            w_ref[pl.ds(n_layer * w_rows, d_model), :],
                            preferred_element_type=jnp.float32)
                    + fs[n_layer * F_ROWS_PER_LAYER:n_layer * F_ROWS_PER_LAYER + 1, :])


# ----------------------------- wrapper ---------------------------------------
def music_transformer_xl(input_ids, params):
    batch, seq_len = input_ids.shape
    bs = batch * seq_len
    L, H, DH = N_LAYER, N_HEAD, D_HEAD
    HD = H * DH

    # embedding lookup (data-dependent gather kept as JAX glue); sqrt(d_model)
    # is folded into the table at init.
    x = params["emb"][input_ids].astype(jnp.float32).reshape(bs, D_MODEL)

    # input-independent relative-position keys rk[l,h] = pos @ Wr[l,h], packed
    # block-diagonally so one in-kernel matmul computes BD for all heads.
    pos = jnp.asarray(sinusoid_pos_emb(seq_len, D_MODEL), jnp.float32)      # (S, D)
    rk_t = jnp.einsum("sd,lhdk->lhks", pos, params["wr"])                   # (L, H, DH, S)
    relpos = jnp.zeros((L, HD, H * seq_len), jnp.float32)
    for h in range(H):
        relpos = relpos.at[:, h * DH:(h + 1) * DH,
                           h * seq_len:(h + 1) * seq_len].set(rk_t[:, h])
    relpos = relpos.astype(jnp.bfloat16)                                    # (L, HD, H*S)

    # additive attention mask (same batch block AND causal) + barrel-shift bit
    # flags: both static given (batch, seq) -> built with numpy (compile-time consts).
    gi, gj = np.meshgrid(np.arange(bs), np.arange(bs), indexing="ij")
    valid = (gi // seq_len == gj // seq_len) & (gj % seq_len <= gi % seq_len)
    mask_bias = np.where(valid, 0.0, -1e30).astype(np.float32)              # (bs, bs)
    n_bits = (seq_len - 1).bit_length()
    t = ((np.arange(bs) % seq_len) + 1) % seq_len                           # per-row shift
    if n_bits > 0:
        bits = np.stack([((t >> j) & 1).astype(np.float32) for j in range(n_bits)], axis=1)
    else:
        bits = np.zeros((bs, 0), np.float32)
    maskshift = jnp.asarray(np.concatenate([mask_bias, bits], axis=1))      # (bs, bs+n_bits)

    operands = (x, params["wslab"], params["fslab"], relpos, maskshift)
    vmem = pl.BlockSpec(memory_space=pltpu.MemorySpace.VMEM)
    out = pl.pallas_call(
        functools.partial(_fused_forward_kernel, n_layer=L, n_head=H, d_head=DH,
                          d_model=D_MODEL, d_inner=D_INNER, seq=seq_len, batch=batch,
                          n_bits=n_bits),
        out_shape=jax.ShapeDtypeStruct((bs, HEAD_PAD), jnp.float32),
        in_specs=[vmem] * len(operands),
        out_specs=vmem,
    )(*operands)

    note = out[:, :NOTE_VOCAB].reshape(batch, seq_len, NOTE_VOCAB)
    dur = out[:, NOTE_VOCAB:NOTE_VOCAB + DURATION_VOCAB].reshape(batch, seq_len, DURATION_VOCAB)
    gap = out[:, NOTE_VOCAB + DURATION_VOCAB:HEAD_TOTAL].reshape(batch, seq_len, GAP_VOCAB)
    return note, dur, gap


# ----------------------------- parameters ------------------------------------
def init_params(key):
    keys = iter(jax.random.split(key, 64))

    def nrm(shape, std=0.02):
        return (std * jax.random.normal(next(keys), shape)).astype(jnp.float32)

    def pad_lane(a, width=SLAB_W):
        pad = width - a.shape[-1]
        return jnp.pad(a, [(0, 0)] * (a.ndim - 1) + [(0, pad)])

    L, H, D, DH, DI = N_LAYER, N_HEAD, D_MODEL, D_HEAD, D_INNER
    HD = H * DH

    p = {}
    # embedding table with the * sqrt(d_model) scale folded in
    p["emb"] = nrm((N_TOKEN, D)) * math.sqrt(D)
    # rel-pos projection weights (only used in the wrapper precompute pos @ Wr)
    p["wr"] = nrm((L, H, D, DH))

    # ---- bf16 weight slab: per layer [Wqkv | Wo | Wff1 | Wff2], then head_w ----
    wq, wk, wv = nrm((L, H, D, DH)), nrm((L, H, D, DH)), nrm((L, H, D, DH))

    def head_major(w):   # (L,H,D,DH) -> (L, D, H*DH), head-major columns
        return jnp.transpose(w, (0, 2, 1, 3)).reshape(L, D, HD)

    wqkv = jnp.concatenate([head_major(wq), head_major(wk), head_major(wv)], axis=-1)  # (L, D, 3*HD)
    wo = nrm((L, H, DH, D)).reshape(L, HD, D)            # head-major rows of Wo
    wff1 = nrm((L, D, DI))
    wff2 = nrm((L, DI, D))
    head_w = jnp.concatenate([nrm((D, NOTE_VOCAB)), nrm((D, DURATION_VOCAB)),
                              nrm((D, GAP_VOCAB))], axis=1)                # (D, 36)

    per_layer = jnp.concatenate(
        [pad_lane(wqkv), pad_lane(wo), pad_lane(wff1), pad_lane(wff2)], axis=1)  # (L, 160, 128)
    p["wslab"] = jnp.concatenate(
        [per_layer.reshape(L * per_layer.shape[1], SLAB_W), pad_lane(head_w)],
        axis=0).astype(jnp.bfloat16)                                       # (352, 128)

    # ---- f32 bias / LN slab: per layer 8 rows, then head bias ----
    rwb = nrm((L, H, DH)).reshape(L, 1, HD)      # r_w_bias (u), head-major
    rrb = nrm((L, H, DH)).reshape(L, 1, HD)      # r_r_bias (v)
    ln1g = jnp.ones((L, 1, D), jnp.float32)
    ln1b = jnp.zeros((L, 1, D), jnp.float32)
    bff1 = jnp.zeros((L, 1, DI), jnp.float32)
    bff2 = jnp.zeros((L, 1, D), jnp.float32)
    ln2g = jnp.ones((L, 1, D), jnp.float32)
    ln2b = jnp.zeros((L, 1, D), jnp.float32)
    head_b = jnp.zeros((1, HEAD_PAD), jnp.float32)

    per_layer_f = jnp.concatenate(
        [pad_lane(rwb), pad_lane(rrb), pad_lane(ln1g), pad_lane(ln1b),
         pad_lane(bff1), pad_lane(bff2), pad_lane(ln2g), pad_lane(ln2b)], axis=1)  # (L, 8, 128)
    p["fslab"] = jnp.concatenate(
        [per_layer_f.reshape(L * F_ROWS_PER_LAYER, SLAB_W), head_b],
        axis=0).astype(jnp.float32)                                        # (17, 128)
    return p


# ----------------------------- main -------------------------------------------
if __name__ == "__main__":
    key = jax.random.PRNGKey(0)
    k_ids, k_params = jax.random.split(key)
    input_ids = jax.random.randint(k_ids, (BATCH, SEQ), 0, N_TOKEN, dtype=jnp.int32)
    params = init_params(k_params)

    fwd = jax.jit(music_transformer_xl)
    note_logits, duration_logits, gap_logits = fwd(input_ids, params)
    jax.block_until_ready((note_logits, duration_logits, gap_logits))

    assert note_logits.shape == (BATCH, SEQ, NOTE_VOCAB)
    assert duration_logits.shape == (BATCH, SEQ, DURATION_VOCAB)
    assert gap_logits.shape == (BATCH, SEQ, GAP_VOCAB)
    assert bool(jnp.all(jnp.isfinite(note_logits)))
    assert bool(jnp.all(jnp.isfinite(duration_logits)))
    assert bool(jnp.all(jnp.isfinite(gap_logits)))
    print("KERNEL_OK")
</pallas_src>

<mosaic_0001>
module attributes {stable_mosaic.version = 11 : i64} {
  func.func @_fused_forward_kernel(%arg0: memref<16x32xf32, #tpu.memory_space<vmem>>, %arg1: memref<352x128xbf16, #tpu.memory_space<vmem>>, %arg2: memref<17x128xf32, #tpu.memory_space<vmem>>, %arg3: memref<2x32x16xbf16, #tpu.memory_space<vmem>>, %arg4: memref<16x19xf32, #tpu.memory_space<vmem>>, %arg5: memref<16x128xf32, #tpu.memory_space<vmem>>) attributes {dimension_semantics = [], scalar_prefetch = 0 : i64, scratch_operands = 0 : i64, tpu.core_type = #tpu.core_type<tc>} {
    %c0 = arith.constant 0 : index
    %c0_0 = arith.constant 0 : index
    %0 = vector.load %arg0[%c0, %c0_0] : memref<16x32xf32, #tpu.memory_space<vmem>>, vector<16x32xf32>
    %c0_1 = arith.constant 0 : index
    %c0_2 = arith.constant 0 : index
    %1 = vector.load %arg2[%c0_1, %c0_2] : memref<17x128xf32, #tpu.memory_space<vmem>>, vector<17x128xf32>
    %c0_3 = arith.constant 0 : index
    %c0_4 = arith.constant 0 : index
    %2 = vector.load %arg4[%c0_3, %c0_4] : memref<16x19xf32, #tpu.memory_space<vmem>>, vector<16x19xf32>
    %3 = vector.extract_strided_slice %2 {offsets = [0, 0], sizes = [16, 16], strides = [1, 1]} : vector<16x19xf32> to vector<16x16xf32>
    %4 = vector.extract_strided_slice %2 {offsets = [0, 16], sizes = [16, 1], strides = [1, 1]} : vector<16x19xf32> to vector<16x1xf32>
    %cst = arith.constant 5.000000e-01 : f32
    %5 = vector.broadcast %cst : f32 to vector<16x1xf32>
    %6 = arith.cmpf ogt, %4, %5 : vector<16x1xf32>
    %7 = vector.extract_strided_slice %2 {offsets = [0, 17], sizes = [16, 1], strides = [1, 1]} : vector<16x19xf32> to vector<16x1xf32>
    %cst_5 = arith.constant 5.000000e-01 : f32
    %8 = vector.broadcast %cst_5 : f32 to vector<16x1xf32>
    %9 = arith.cmpf ogt, %7, %8 : vector<16x1xf32>
    %10 = vector.extract_strided_slice %2 {offsets = [0, 18], sizes = [16, 1], strides = [1, 1]} : vector<16x19xf32> to vector<16x1xf32>
    %cst_6 = arith.constant 5.000000e-01 : f32
    %11 = vector.broadcast %cst_6 : f32 to vector<16x1xf32>
    %12 = arith.cmpf ogt, %10, %11 : vector<16x1xf32>
    %13 = arith.truncf %0 : vector<16x32xf32> to vector<16x32xbf16>
    %c0_7 = arith.constant 0 : index
    %c0_8 = arith.constant 0 : index
    %14 = vector.load %arg1[%c0_7, %c0_8] : memref<352x128xbf16, #tpu.memory_space<vmem>>, vector<32x128xbf16>
    %cst_9 = arith.constant dense<0.000000e+00> : vector<16x128xf32>
    %15 = tpu.matmul %13, %14, %cst_9 {dimension_numbers = #tpu.dot_dimension_numbers<[1], [0], [0], [1], [0, 0, 1, 1], [], []>} : vector<16x32xbf16>, vector<32x128xbf16>, vector<16x128xf32> -> vector<16x128xf32>
    %16 = vector.extract_strided_slice %15 {offsets = [0, 0], sizes = [16, 32], strides = [1, 1]} : vector<16x128xf32> to vector<16x32xf32>
    %17 = vector.extract_strided_slice %15 {offsets = [0, 32], sizes = [16, 32], strides = [1, 1]} : vector<16x128xf32> to vector<16x32xf32>
    %18 = arith.truncf %17 : vector<16x32xf32> to vector<16x32xbf16>
    %19 = vector.extract_strided_slice %15 {offsets = [0, 64], sizes = [16, 32], strides = [1, 1]} : vector<16x128xf32> to vector<16x32xf32>
    %20 = arith.truncf %19 : vector<16x32xf32> to vector<16x32xbf16>
    %21 = vector.extract_strided_slice %1 {offsets = [0, 0], sizes = [1, 32], strides = [1, 1]} : vector<17x128xf32> to vector<1x32xf32>
    %22 = vector.broadcast %21 : vector<1x32xf32> to vector<16x32xf32>
    %23 = arith.addf %16, %22 : vector<16x32xf32>
    %24 = arith.truncf %23 : vector<16x32xf32> to vector<16x32xbf16>
    %25 = vector.extract_strided_slice %1 {offsets = [1, 0], sizes = [1, 32], strides = [1, 1]} : vector<17x128xf32> to vector<1x32xf32>
    %26 = vector.broadcast %25 : vector<1x32xf32> to vector<16x32xf32>
    %27 = arith.addf %16, %26 : vector<16x32xf32>
    %28 = arith.truncf %27 : vector<16x32xf32> to vector<16x32xbf16>
    %c0_10 = arith.constant 0 : index
    %c0_11 = arith.constant 0 : index
    %c0_12 = arith.constant 0 : index
    %29 = vector.load %arg3[%c0_10, %c0_11, %c0_12] : memref<2x32x16xbf16, #tpu.memory_space<vmem>>, vector<1x32x16xbf16>
    %30 = vector.shape_cast %29 : vector<1x32x16xbf16> to vector<32x16xbf16>
    %cst_13 = arith.constant dense<0.000000e+00> : vector<16x16xf32>
    %31 = tpu.matmul %28, %30, %cst_13 {dimension_numbers = #tpu.dot_dimension_numbers<[1], [0], [0], [1], [0, 0, 1, 1], [], []>} : vector<16x32xbf16>, vector<32x16xbf16>, vector<16x16xf32> -> vector<16x16xf32>
    %32 = vector.extract_strided_slice %24 {offsets = [0, 0], sizes = [16, 16], strides = [1, 1]} : vector<16x32xbf16> to vector<16x16xbf16>
    %33 = vector.extract_strided_slice %18 {offsets = [0, 0], sizes = [16, 16], strides = [1, 1]} : vector<16x32xbf16> to vector<16x16xbf16>
    %34 = vector.extract_strided_slice %20 {offsets = [0, 0], sizes = [16, 16], strides = [1, 1]} : vector<16x32xbf16> to vector<16x16xbf16>
    %cst_14 = arith.constant dense<0.000000e+00> : vector<16x16xf32>
    %35 = tpu.matmul %32, %33, %cst_14 {dimension_numbers = #tpu.dot_dimension_numbers<[1], [1], [0], [0], [0, 0, 1, 0], [], []>} : vector<16x16xbf16>, vector<16x16xbf16>, vector<16x16xf32> -> vector<16x16xf32>
    %36 = vector.extract_strided_slice %31 {offsets = [0, 0], sizes = [16, 8], strides = [1, 1]} : vector<16x16xf32> to vector<16x8xf32>
    %37 = vector.extract_strided_slice %36 {offsets = [0, 7], sizes = [16, 1], strides = [1, 1]} : vector<16x8xf32> to vector<16x1xf32>
    %38 = vector.extract_strided_slice %36 {offsets = [0, 0], sizes = [16, 7], strides = [1, 1]} : vector<16x8xf32> to vector<16x7xf32>
    %39 = tpu.concatenate %37, %38 in 1 : vector<16x1xf32>, vector<16x7xf32> -> vector<16x8xf32>
    %40 = vector.shape_cast %6 : vector<16x1xi1> to vector<16x1xi1>
    %41 = vector.broadcast %40 : vector<16x1xi1> to vector<16x8xi1>
    %42 = arith.select %41, %39, %36 : vector<16x8xi1>, vector<16x8xf32>
    %43 = vector.extract_strided_slice %42 {offsets = [0, 6], sizes = [16, 2], strides = [1, 1]} : vector<16x8xf32> to vector<16x2xf32>
    %44 = vector.extract_strided_slice %42 {offsets = [0, 0], sizes = [16, 6], strides = [1, 1]} : vector<16x8xf32> to vector<16x6xf32>
    %45 = tpu.concatenate %43, %44 in 1 : vector<16x2xf32>, vector<16x6xf32> -> vector<16x8xf32>
    %46 = vector.shape_cast %9 : vector<16x1xi1> to vector<16x1xi1>
    %47 = vector.broadcast %46 : vector<16x1xi1> to vector<16x8xi1>
    %48 = arith.select %47, %45, %42 : vector<16x8xi1>, vector<16x8xf32>
    %49 = vector.extract_strided_slice %48 {offsets = [0, 4], sizes = [16, 4], strides = [1, 1]} : vector<16x8xf32> to vector<16x4xf32>
    %50 = vector.extract_strided_slice %48 {offsets = [0, 0], sizes = [16, 4], strides = [1, 1]} : vector<16x8xf32> to vector<16x4xf32>
    %51 = tpu.concatenate %49, %50 in 1 : vector<16x4xf32>, vector<16x4xf32> -> vector<16x8xf32>
    %52 = vector.shape_cast %12 : vector<16x1xi1> to vector<16x1xi1>
    %53 = vector.broadcast %52 : vector<16x1xi1> to vector<16x8xi1>
    %54 = arith.select %53, %51, %48 : vector<16x8xi1>, vector<16x8xf32>
    %55 = tpu.concatenate %54, %54 in 1 : vector<16x8xf32>, vector<16x8xf32> -> vector<16x16xf32>
    %56 = arith.addf %35, %55 : vector<16x16xf32>
    %cst_15 = arith.constant 2.500000e-01 : f32
    %57 = vector.broadcast %cst_15 : f32 to vector<16x16xf32>
    %58 = arith.mulf %56, %57 : vector<16x16xf32>
    %59 = arith.addf %58, %3 : vector<16x16xf32>
    %cst_16 = arith.constant dense<0xFF800000> : vector<16xf32>
    %60 = vector.multi_reduction <maximumf>, %59, %cst_16 [1] : vector<16x16xf32> to vector<16xf32>
    %61 = vector.shape_cast %60 : vector<16xf32> to vector<16x1xf32>
    %62 = vector.broadcast %61 : vector<16x1xf32> to vector<16x16xf32>
    %63 = arith.subf %59, %62 : vector<16x16xf32>
    %64 = math.exp %63 : vector<16x16xf32>
    %cst_17 = arith.constant dense<0.000000e+00> : vector<16xf32>
    %65 = vector.multi_reduction <add>, %64, %cst_17 [1] : vector<16x16xf32> to vector<16xf32>
    %66 = vector.shape_cast %65 : vector<16xf32> to vector<16x1xf32>
    %67 = tpu.reciprocal %66 {approx = true} : vector<16x1xf32> -> vector<16x1xf32>
    %68 = vector.broadcast %67 : vector<16x1xf32> to vector<16x16xf32>
    %69 = arith.mulf %64, %68 : vector<16x16xf32>
    %70 = arith.truncf %69 : vector<16x16xf32> to vector<16x16xbf16>
    %cst_18 = arith.constant dense<0.000000e+00> : vector<16x16xf32>
    %71 = tpu.matmul %70, %34, %cst_18 {dimension_numbers = #tpu.dot_dimension_numbers<[1], [0], [0], [1], [0, 0, 1, 1], [], []>} : vector<16x16xbf16>, vector<16x16xbf16>, vector<16x16xf32> -> vector<16x16xf32>
    %72 = vector.extract_strided_slice %24 {offsets = [0, 16], sizes = [16, 16], strides = [1, 1]} : vector<16x32xbf16> to vector<16x16xbf16>
    %73 = vector.extract_strided_slice %18 {offsets = [0, 16], sizes = [16, 16], strides = [1, 1]} : vector<16x32xbf16> to vector<16x16xbf16>
    %74 = vector.extract_strided_slice %20 {offsets = [0, 16], sizes = [16, 16], strides = [1, 1]} : vector<16x32xbf16> to vector<16x16xbf16>
    %cst_19 = arith.constant dense<0.000000e+00> : vector<16x16xf32>
    %75 = tpu.matmul %72, %73, %cst_19 {dimension_numbers = #tpu.dot_dimension_numbers<[1], [1], [0], [0], [0, 0, 1, 0], [], []>} : vector<16x16xbf16>, vector<16x16xbf16>, vector<16x16xf32> -> vector<16x16xf32>
    %76 = vector.extract_strided_slice %31 {offsets = [0, 8], sizes = [16, 8], strides = [1, 1]} : vector<16x16xf32> to vector<16x8xf32>
    %77 = vector.extract_strided_slice %76 {offsets = [0, 7], sizes = [16, 1], strides = [1, 1]} : vector<16x8xf32> to vector<16x1xf32>
    %78 = vector.extract_strided_slice %76 {offsets = [0, 0], sizes = [16, 7], strides = [1, 1]} : vector<16x8xf32> to vector<16x7xf32>
    %79 = tpu.concatenate %77, %78 in 1 : vector<16x1xf32>, vector<16x7xf32> -> vector<16x8xf32>
    %80 = vector.shape_cast %6 : vector<16x1xi1> to vector<16x1xi1>
    %81 = vector.broadcast %80 : vector<16x1xi1> to vector<16x8xi1>
    %82 = arith.select %81, %79, %76 : vector<16x8xi1>, vector<16x8xf32>
    %83 = vector.extract_strided_slice %82 {offsets = [0, 6], sizes = [16, 2], strides = [1, 1]} : vector<16x8xf32> to vector<16x2xf32>
    %84 = vector.extract_strided_slice %82 {offsets = [0, 0], sizes = [16, 6], strides = [1, 1]} : vector<16x8xf32> to vector<16x6xf32>
    %85 = tpu.concatenate %83, %84 in 1 : vector<16x2xf32>, vector<16x6xf32> -> vector<16x8xf32>
    %86 = vector.shape_cast %9 : vector<16x1xi1> to vector<16x1xi1>
    %87 = vector.broadcast %86 : vector<16x1xi1> to vector<16x8xi1>
    %88 = arith.select %87, %85, %82 : vector<16x8xi1>, vector<16x8xf32>
    %89 = vector.extract_strided_slice %88 {offsets = [0, 4], sizes = [16, 4], strides = [1, 1]} : vector<16x8xf32> to vector<16x4xf32>
    %90 = vector.extract_strided_slice %88 {offsets = [0, 0], sizes = [16, 4], strides = [1, 1]} : vector<16x8xf32> to vector<16x4xf32>
    %91 = tpu.concatenate %89, %90 in 1 : vector<16x4xf32>, vector<16x4xf32> -> vector<16x8xf32>
    %92 = vector.shape_cast %12 : vector<16x1xi1> to vector<16x1xi1>
    %93 = vector.broadcast %92 : vector<16x1xi1> to vector<16x8xi1>
    %94 = arith.select %93, %91, %88 : vector<16x8xi1>, vector<16x8xf32>
    %95 = tpu.concatenate %94, %94 in 1 : vector<16x8xf32>, vector<16x8xf32> -> vector<16x16xf32>
    %96 = arith.addf %75, %95 : vector<16x16xf32>
    %cst_20 = arith.constant 2.500000e-01 : f32
    %97 = vector.broadcast %cst_20 : f32 to vector<16x16xf32>
    %98 = arith.mulf %96, %97 : vector<16x16xf32>
    %99 = arith.addf %98, %3 : vector<16x16xf32>
    %cst_21 = arith.constant dense<0xFF800000> : vector<16xf32>
    %100 = vector.multi_reduction <maximumf>, %99, %cst_21 [1] : vector<16x16xf32> to vector<16xf32>
    %101 = vector.shape_cast %100 : vector<16xf32> to vector<16x1xf32>
    %102 = vector.broadcast %101 : vector<16x1xf32> to vector<16x16xf32>
    %103 = arith.subf %99, %102 : vector<16x16xf32>
    %104 = math.exp %103 : vector<16x16xf32>
    %cst_22 = arith.constant dense<0.000000e+00> : vector<16xf32>
    %105 = vector.multi_reduction <add>, %104, %cst_22 [1] : vector<16x16xf32> to vector<16xf32>
    %106 = vector.shape_cast %105 : vector<16xf32> to vector<16x1xf32>
    %107 = tpu.reciprocal %106 {approx = true} : vector<16x1xf32> -> vector<16x1xf32>
    %108 = vector.broadcast %107 : vector<16x1xf32> to vector<16x16xf32>
    %109 = arith.mulf %104, %108 : vector<16x16xf32>
    %110 = arith.truncf %109 : vector<16x16xf32> to vector<16x16xbf16>
    %cst_23 = arith.constant dense<0.000000e+00> : vector<16x16xf32>
    %111 = tpu.matmul %110, %74, %cst_23 {dimension_numbers = #tpu.dot_dimension_numbers<[1], [0], [0], [1], [0, 0, 1, 1], [], []>} : vector<16x16xbf16>, vector<16x16xbf16>, vector<16x16xf32> -> vector<16x16xf32>
    %112 = tpu.concatenate %71, %111 in 1 : vector<16x16xf32>, vector<16x16xf32> -> vector<16x32xf32>
    %113 = arith.truncf %112 : vector<16x32xf32> to vector<16x32xbf16>
    %c32 = arith.constant 32 : index
    %c0_24 = arith.constant 0 : index
    %114 = vector.load %arg1[%c32, %c0_24] : memref<352x128xbf16, #tpu.memory_space<vmem>>, vector<32x128xbf16>
    %cst_25 = arith.constant dense<0.000000e+00> : vector<16x128xf32>
    %115 = tpu.matmul %113, %114, %cst_25 {dimension_numbers = #tpu.dot_dimension_numbers<[1], [0], [0], [1], [0, 0, 1, 1], [], []>} : vector<16x32xbf16>, vector<32x128xbf16>, vector<16x128xf32> -> vector<16x128xf32>
    %116 = vector.extract_strided_slice %115 {offsets = [0, 0], sizes = [16, 32], strides = [1, 1]} : vector<16x128xf32> to vector<16x32xf32>
    %117 = arith.addf %0, %116 : vector<16x32xf32>
    %118 = vector.extract_strided_slice %1 {offsets = [2, 0], sizes = [1, 32], strides = [1, 1]} : vector<17x128xf32> to vector<1x32xf32>
    %119 = vector.extract_strided_slice %1 {offsets = [3, 0], sizes = [1, 32], strides = [1, 1]} : vector<17x128xf32> to vector<1x32xf32>
    %cst_26 = arith.constant dense<0.000000e+00> : vector<16xf32>
    %120 = vector.multi_reduction <add>, %117, %cst_26 [1] : vector<16x32xf32> to vector<16xf32>
    %121 = vector.shape_cast %120 : vector<16xf32> to vector<16x1xf32>
    %cst_27 = arith.constant 3.200000e+01 : f32
    %122 = vector.broadcast %cst_27 : f32 to vector<16x1xf32>
    %123 = arith.divf %121, %122 : vector<16x1xf32>
    %124 = vector.broadcast %123 : vector<16x1xf32> to vector<16x32xf32>
    %125 = arith.subf %117, %124 : vector<16x32xf32>
    %126 = arith.mulf %125, %125 : vector<16x32xf32>
    %cst_28 = arith.constant dense<0.000000e+00> : vector<16xf32>
    %127 = vector.multi_reduction <add>, %126, %cst_28 [1] : vector<16x32xf32> to vector<16xf32>
    %128 = vector.shape_cast %127 : vector<16xf32> to vector<16x1xf32>
    %cst_29 = arith.constant 3.200000e+01 : f32
    %129 = vector.broadcast %cst_29 : f32 to vector<16x1xf32>
    %130 = arith.divf %128, %129 : vector<16x1xf32>
    %131 = vector.broadcast %123 : vector<16x1xf32> to vector<16x32xf32>
    %132 = arith.subf %117, %131 : vector<16x32xf32>
    %cst_30 = arith.constant 9.99999974E-6 : f32
    %133 = vector.broadcast %cst_30 : f32 to vector<16x1xf32>
    %134 = arith.addf %130, %133 : vector<16x1xf32>
    %135 = math.rsqrt %134 : vector<16x1xf32>
    %136 = vector.broadcast %135 : vector<16x1xf32> to vector<16x32xf32>
    %137 = arith.mulf %132, %136 : vector<16x32xf32>
    %138 = vector.broadcast %118 : vector<1x32xf32> to vector<16x32xf32>
    %139 = arith.mulf %137, %138 : vector<16x32xf32>
    %140 = vector.broadcast %119 : vector<1x32xf32> to vector<16x32xf32>
    %141 = arith.addf %139, %140 : vector<16x32xf32>
    %142 = arith.truncf %141 : vector<16x32xf32> to vector<16x32xbf16>
    %c64 = arith.constant 64 : index
    %c0_31 = arith.constant 0 : index
    %143 = vector.load %arg1[%c64, %c0_31] : memref<352x128xbf16, #tpu.memory_space<vmem>>, vector<32x128xbf16>
    %cst_32 = arith.constant dense<0.000000e+00> : vector<16x128xf32>
    %144 = tpu.matmul %142, %143, %cst_32 {dimension_numbers = #tpu.dot_dimension_numbers<[1], [0], [0], [1], [0, 0, 1, 1], [], []>} : vector<16x32xbf16>, vector<32x128xbf16>, vector<16x128xf32> -> vector<16x128xf32>
    %145 = vector.extract_strided_slice %144 {offsets = [0, 0], sizes = [16, 64], strides = [1, 1]} : vector<16x128xf32> to vector<16x64xf32>
    %146 = vector.extract_strided_slice %1 {offsets = [4, 0], sizes = [1, 64], strides = [1, 1]} : vector<17x128xf32> to vector<1x64xf32>
    %147 = vector.broadcast %146 : vector<1x64xf32> to vector<16x64xf32>
    %148 = arith.addf %145, %147 : vector<16x64xf32>
    %cst_33 = arith.constant 0.000000e+00 : f32
    %149 = vector.broadcast %cst_33 : f32 to vector<16x64xf32>
    %150 = arith.maximumf %148, %149 : vector<16x64xf32>
    %151 = arith.truncf %150 : vector<16x64xf32> to vector<16x64xbf16>
    %c96 = arith.constant 96 : index
    %c0_34 = arith.constant 0 : index
    %152 = vector.load %arg1[%c96, %c0_34] : memref<352x128xbf16, #tpu.memory_space<vmem>>, vector<64x128xbf16>
    %cst_35 = arith.constant dense<0.000000e+00> : vector<16x128xf32>
    %153 = tpu.matmul %151, %152, %cst_35 {dimension_numbers = #tpu.dot_dimension_numbers<[1], [0], [0], [1], [0, 0, 1, 1], [], []>} : vector<16x64xbf16>, vector<64x128xbf16>, vector<16x128xf32> -> vector<16x128xf32>
    %154 = vector.extract_strided_slice %153 {offsets = [0, 0], sizes = [16, 32], strides = [1, 1]} : vector<16x128xf32> to vector<16x32xf32>
    %155 = vector.extract_strided_slice %1 {offsets = [5, 0], sizes = [1, 32], strides = [1, 1]} : vector<17x128xf32> to vector<1x32xf32>
    %156 = vector.broadcast %155 : vector<1x32xf32> to vector<16x32xf32>
    %157 = arith.addf %154, %156 : vector<16x32xf32>
    %158 = arith.addf %141, %157 : vector<16x32xf32>
    %159 = vector.extract_strided_slice %1 {offsets = [6, 0], sizes = [1, 32], strides = [1, 1]} : vector<17x128xf32> to vector<1x32xf32>
    %160 = vector.extract_strided_slice %1 {offsets = [7, 0], sizes = [1, 32], strides = [1, 1]} : vector<17x128xf32> to vector<1x32xf32>
    %cst_36 = arith.constant dense<0.000000e+00> : vector<16xf32>
    %161 = vector.multi_reduction <add>, %158, %cst_36 [1] : vector<16x32xf32> to vector<16xf32>
    %162 = vector.shape_cast %161 : vector<16xf32> to vector<16x1xf32>
    %cst_37 = arith.constant 3.200000e+01 : f32
    %163 = vector.broadcast %cst_37 : f32 to vector<16x1xf32>
    %164 = arith.divf %162, %163 : vector<16x1xf32>
    %165 = vector.broadcast %164 : vector<16x1xf32> to vector<16x32xf32>
    %166 = arith.subf %158, %165 : vector<16x32xf32>
    %167 = arith.mulf %166, %166 : vector<16x32xf32>
    %cst_38 = arith.constant dense<0.000000e+00> : vector<16xf32>
    %168 = vector.multi_reduction <add>, %167, %cst_38 [1] : vector<16x32xf32> to vector<16xf32>
    %169 = vector.shape_cast %168 : vector<16xf32> to vector<16x1xf32>
    %cst_39 = arith.constant 3.200000e+01 : f32
    %170 = vector.broadcast %cst_39 : f32 to vector<16x1xf32>
    %171 = arith.divf %169, %170 : vector<16x1xf32>
    %172 = vector.broadcast %164 : vector<16x1xf32> to vector<16x32xf32>
    %173 = arith.subf %158, %172 : vector<16x32xf32>
    %cst_40 = arith.constant 9.99999974E-6 : f32
    %174 = vector.broadcast %cst_40 : f32 to vector<16x1xf32>
    %175 = arith.addf %171, %174 : vector<16x1xf32>
    %176 = math.rsqrt %175 : vector<16x1xf32>
    %177 = vector.broadcast %176 : vector<16x1xf32> to vector<16x32xf32>
    %178 = arith.mulf %173, %177 : vector<16x32xf32>
    %179 = vector.broadcast %159 : vector<1x32xf32> to vector<16x32xf32>
    %180 = arith.mulf %178, %179 : vector<16x32xf32>
    %181 = vector.broadcast %160 : vector<1x32xf32> to vector<16x32xf32>
    %182 = arith.addf %180, %181 : vector<16x32xf32>
    %183 = arith.truncf %182 : vector<16x32xf32> to vector<16x32xbf16>
    %c160 = arith.constant 160 : index
    %c0_41 = arith.constant 0 : index
    %184 = vector.load %arg1[%c160, %c0_41] : memref<352x128xbf16, #tpu.memory_space<vmem>>, vector<32x128xbf16>
    %cst_42 = arith.constant dense<0.000000e+00> : vector<16x128xf32>
    %185 = tpu.matmul %183, %184, %cst_42 {dimension_numbers = #tpu.dot_dimension_numbers<[1], [0], [0], [1], [0, 0, 1, 1], [], []>} : vector<16x32xbf16>, vector<32x128xbf16>, vector<16x128xf32> -> vector<16x128xf32>
    %186 = vector.extract_strided_slice %185 {offsets = [0, 0], sizes = [16, 32], strides = [1, 1]} : vector<16x128xf32> to vector<16x32xf32>
    %187 = vector.extract_strided_slice %185 {offsets = [0, 32], sizes = [16, 32], strides = [1, 1]} : vector<16x128xf32> to vector<16x32xf32>
    %188 = arith.truncf %187 : vector<16x32xf32> to vector<16x32xbf16>
    %189 = vector.extract_strided_slice %185 {offsets = [0, 64], sizes = [16, 32], strides = [1, 1]} : vector<16x128xf32> to vector<16x32xf32>
    %190 = arith.truncf %189 : vector<16x32xf32> to vector<16x32xbf16>
    %191 = vector.extract_strided_slice %1 {offsets = [8, 0], sizes = [1, 32], strides = [1, 1]} : vector<17x128xf32> to vector<1x32xf32>
    %192 = vector.broadcast %191 : vector<1x32xf32> to vector<16x32xf32>
    %193 = arith.addf %186, %192 : vector<16x32xf32>
    %194 = arith.truncf %193 : vector<16x32xf32> to vector<16x32xbf16>
    %195 = vector.extract_strided_slice %1 {offsets = [9, 0], sizes = [1, 32], strides = [1, 1]} : vector<17x128xf32> to vector<1x32xf32>
    %196 = vector.broadcast %195 : vector<1x32xf32> to vector<16x32xf32>
    %197 = arith.addf %186, %196 : vector<16x32xf32>
    %198 = arith.truncf %197 : vector<16x32xf32> to vector<16x32xbf16>
    %c1 = arith.constant 1 : index
    %c0_43 = arith.constant 0 : index
    %c0_44 = arith.constant 0 : index
    %199 = vector.load %arg3[%c1, %c0_43, %c0_44] : memref<2x32x16xbf16, #tpu.memory_space<vmem>>, vector<1x32x16xbf16>
    %200 = vector.shape_cast %199 : vector<1x32x16xbf16> to vector<32x16xbf16>
    %cst_45 = arith.constant dense<0.000000e+00> : vector<16x16xf32>
    %201 = tpu.matmul %198, %200, %cst_45 {dimension_numbers = #tpu.dot_dimension_numbers<[1], [0], [0], [1], [0, 0, 1, 1], [], []>} : vector<16x32xbf16>, vector<32x16xbf16>, vector<16x16xf32> -> vector<16x16xf32>
    %202 = vector.extract_strided_slice %194 {offsets = [0, 0], sizes = [16, 16], strides = [1, 1]} : vector<16x32xbf16> to vector<16x16xbf16>
    %203 = vector.extract_strided_slice %188 {offsets = [0, 0], sizes = [16, 16], strides = [1, 1]} : vector<16x32xbf16> to vector<16x16xbf16>
    %204 = vector.extract_strided_slice %190 {offsets = [0, 0], sizes = [16, 16], strides = [1, 1]} : vector<16x32xbf16> to vector<16x16xbf16>
    %cst_46 = arith.constant dense<0.000000e+00> : vector<16x16xf32>
    %205 = tpu.matmul %202, %203, %cst_46 {dimension_numbers = #tpu.dot_dimension_numbers<[1], [1], [0], [0], [0, 0, 1, 0], [], []>} : vector<16x16xbf16>, vector<16x16xbf16>, vector<16x16xf32> -> vector<16x16xf32>
    %206 = vector.extract_strided_slice %201 {offsets = [0, 0], sizes = [16, 8], strides = [1, 1]} : vector<16x16xf32> to vector<16x8xf32>
    %207 = vector.extract_strided_slice %206 {offsets = [0, 7], sizes = [16, 1], strides = [1, 1]} : vector<16x8xf32> to vector<16x1xf32>
    %208 = vector.extract_strided_slice %206 {offsets = [0, 0], sizes = [16, 7], strides = [1, 1]} : vector<16x8xf32> to vector<16x7xf32>
    %209 = tpu.concatenate %207, %208 in 1 : vector<16x1xf32>, vector<16x7xf32> -> vector<16x8xf32>
    %210 = vector.shape_cast %6 : vector<16x1xi1> to vector<16x1xi1>
    %211 = vector.broadcast %210 : vector<16x1xi1> to vector<16x8xi1>
    %212 = arith.select %211, %209, %206 : vector<16x8xi1>, vector<16x8xf32>
    %213 = vector.extract_strided_slice %212 {offsets = [0, 6], sizes = [16, 2], strides = [1, 1]} : vector<16x8xf32> to vector<16x2xf32>
    %214 = vector.extract_strided_slice %212 {offsets = [0, 0], sizes = [16, 6], strides = [1, 1]} : vector<16x8xf32> to vector<16x6xf32>
    %215 = tpu.concatenate %213, %214 in 1 : vector<16x2xf32>, vector<16x6xf32> -> vector<16x8xf32>
    %216 = vector.shape_cast %9 : vector<16x1xi1> to vector<16x1xi1>
    %217 = vector.broadcast %216 : vector<16x1xi1> to vector<16x8xi1>
    %218 = arith.select %217, %215, %212 : vector<16x8xi1>, vector<16x8xf32>
    %219 = vector.extract_strided_slice %218 {offsets = [0, 4], sizes = [16, 4], strides = [1, 1]} : vector<16x8xf32> to vector<16x4xf32>
    %220 = vector.extract_strided_slice %218 {offsets = [0, 0], sizes = [16, 4], strides = [1, 1]} : vector<16x8xf32> to vector<16x4xf32>
    %221 = tpu.concatenate %219, %220 in 1 : vector<16x4xf32>, vector<16x4xf32> -> vector<16x8xf32>
    %222 = vector.shape_cast %12 : vector<16x1xi1> to vector<16x1xi1>
    %223 = vector.broadcast %222 : vector<16x1xi1> to vector<16x8xi1>
    %224 = arith.select %223, %221, %218 : vector<16x8xi1>, vector<16x8xf32>
    %225 = tpu.concatenate %224, %224 in 1 : vector<16x8xf32>, vector<16x8xf32> -> vector<16x16xf32>
    %226 = arith.addf %205, %225 : vector<16x16xf32>
    %cst_47 = arith.constant 2.500000e-01 : f32
    %227 = vector.broadcast %cst_47 : f32 to vector<16x16xf32>
    %228 = arith.mulf %226, %227 : vector<16x16xf32>
    %229 = arith.addf %228, %3 : vector<16x16xf32>
    %cst_48 = arith.constant dense<0xFF800000> : vector<16xf32>
    %230 = vector.multi_reduction <maximumf>, %229, %cst_48 [1] : vector<16x16xf32> to vector<16xf32>
    %231 = vector.shape_cast %230 : vector<16xf32> to vector<16x1xf32>
    %232 = vector.broadcast %231 : vector<16x1xf32> to vector<16x16xf32>
    %233 = arith.subf %229, %232 : vector<16x16xf32>
    %234 = math.exp %233 : vector<16x16xf32>
    %cst_49 = arith.constant dense<0.000000e+00> : vector<16xf32>
    %235 = vector.multi_reduction <add>, %234, %cst_49 [1] : vector<16x16xf32> to vector<16xf32>
    %236 = vector.shape_cast %235 : vector<16xf32> to vector<16x1xf32>
    %237 = tpu.reciprocal %236 {approx = true} : vector<16x1xf32> -> vector<16x1xf32>
    %238 = vector.broadcast %237 : vector<16x1xf32> to vector<16x16xf32>
    %239 = arith.mulf %234, %238 : vector<16x16xf32>
    %240 = arith.truncf %239 : vector<16x16xf32> to vector<16x16xbf16>
    %cst_50 = arith.constant dense<0.000000e+00> : vector<16x16xf32>
    %241 = tpu.matmul %240, %204, %cst_50 {dimension_numbers = #tpu.dot_dimension_numbers<[1], [0], [0], [1], [0, 0, 1, 1], [], []>} : vector<16x16xbf16>, vector<16x16xbf16>, vector<16x16xf32> -> vector<16x16xf32>
    %242 = vector.extract_strided_slice %194 {offsets = [0, 16], sizes = [16, 16], strides = [1, 1]} : vector<16x32xbf16> to vector<16x16xbf16>
    %243 = vector.extract_strided_slice %188 {offsets = [0, 16], sizes = [16, 16], strides = [1, 1]} : vector<16x32xbf16> to vector<16x16xbf16>
    %244 = vector.extract_strided_slice %190 {offsets = [0, 16], sizes = [16, 16], strides = [1, 1]} : vector<16x32xbf16> to vector<16x16xbf16>
    %cst_51 = arith.constant dense<0.000000e+00> : vector<16x16xf32>
    %245 = tpu.matmul %242, %243, %cst_51 {dimension_numbers = #tpu.dot_dimension_numbers<[1], [1], [0], [0], [0, 0, 1, 0], [], []>} : vector<16x16xbf16>, vector<16x16xbf16>, vector<16x16xf32> -> vector<16x16xf32>
    %246 = vector.extract_strided_slice %201 {offsets = [0, 8], sizes = [16, 8], strides = [1, 1]} : vector<16x16xf32> to vector<16x8xf32>
    %247 = vector.extract_strided_slice %246 {offsets = [0, 7], sizes = [16, 1], strides = [1, 1]} : vector<16x8xf32> to vector<16x1xf32>
    %248 = vector.extract_strided_slice %246 {offsets = [0, 0], sizes = [16, 7], strides = [1, 1]} : vector<16x8xf32> to vector<16x7xf32>
    %249 = tpu.concatenate %247, %248 in 1 : vector<16x1xf32>, vector<16x7xf32> -> vector<16x8xf32>
    %250 = vector.shape_cast %6 : vector<16x1xi1> to vector<16x1xi1>
    %251 = vector.broadcast %250 : vector<16x1xi1> to vector<16x8xi1>
    %252 = arith.select %251, %249, %246 : vector<16x8xi1>, vector<16x8xf32>
    %253 = vector.extract_strided_slice %252 {offsets = [0, 6], sizes = [16, 2], strides = [1, 1]} : vector<16x8xf32> to vector<16x2xf32>
    %254 = vector.extract_strided_slice %252 {offsets = [0, 0], sizes = [16, 6], strides = [1, 1]} : vector<16x8xf32> to vector<16x6xf32>
    %255 = tpu.concatenate %253, %254 in 1 : vector<16x2xf32>, vector<16x6xf32> -> vector<16x8xf32>
    %256 = vector.shape_cast %9 : vector<16x1xi1> to vector<16x1xi1>
    %257 = vector.broadcast %256 : vector<16x1xi1> to vector<16x8xi1>
    %258 = arith.select %257, %255, %252 : vector<16x8xi1>, vector<16x8xf32>
    %259 = vector.extract_strided_slice %258 {offsets = [0, 4], sizes = [16, 4], strides = [1, 1]} : vector<16x8xf32> to vector<16x4xf32>
    %260 = vector.extract_strided_slice %258 {offsets = [0, 0], sizes = [16, 4], strides = [1, 1]} : vector<16x8xf32> to vector<16x4xf32>
    %261 = tpu.concatenate %259, %260 in 1 : vector<16x4xf32>, vector<16x4xf32> -> vector<16x8xf32>
    %262 = vector.shape_cast %12 : vector<16x1xi1> to vector<16x1xi1>
    %263 = vector.broadcast %262 : vector<16x1xi1> to vector<16x8xi1>
    %264 = arith.select %263, %261, %258 : vector<16x8xi1>, vector<16x8xf32>
    %265 = tpu.concatenate %264, %264 in 1 : vector<16x8xf32>, vector<16x8xf32> -> vector<16x16xf32>
    %266 = arith.addf %245, %265 : vector<16x16xf32>
    %cst_52 = arith.constant 2.500000e-01 : f32
    %267 = vector.broadcast %cst_52 : f32 to vector<16x16xf32>
    %268 = arith.mulf %266, %267 : vector<16x16xf32>
    %269 = arith.addf %268, %3 : vector<16x16xf32>
    %cst_53 = arith.constant dense<0xFF800000> : vector<16xf32>
    %270 = vector.multi_reduction <maximumf>, %269, %cst_53 [1] : vector<16x16xf32> to vector<16xf32>
    %271 = vector.shape_cast %270 : vector<16xf32> to vector<16x1xf32>
    %272 = vector.broadcast %271 : vector<16x1xf32> to vector<16x16xf32>
    %273 = arith.subf %269, %272 : vector<16x16xf32>
    %274 = math.exp %273 : vector<16x16xf32>
    %cst_54 = arith.constant dense<0.000000e+00> : vector<16xf32>
    %275 = vector.multi_reduction <add>, %274, %cst_54 [1] : vector<16x16xf32> to vector<16xf32>
    %276 = vector.shape_cast %275 : vector<16xf32> to vector<16x1xf32>
    %277 = tpu.reciprocal %276 {approx = true} : vector<16x1xf32> -> vector<16x1xf32>
    %278 = vector.broadcast %277 : vector<16x1xf32> to vector<16x16xf32>
    %279 = arith.mulf %274, %278 : vector<16x16xf32>
    %280 = arith.truncf %279 : vector<16x16xf32> to vector<16x16xbf16>
    %cst_55 = arith.constant dense<0.000000e+00> : vector<16x16xf32>
    %281 = tpu.matmul %280, %244, %cst_55 {dimension_numbers = #tpu.dot_dimension_numbers<[1], [0], [0], [1], [0, 0, 1, 1], [], []>} : vector<16x16xbf16>, vector<16x16xbf16>, vector<16x16xf32> -> vector<16x16xf32>
    %282 = tpu.concatenate %241, %281 in 1 : vector<16x16xf32>, vector<16x16xf32> -> vector<16x32xf32>
    %283 = arith.truncf %282 : vector<16x32xf32> to vector<16x32xbf16>
    %c192 = arith.constant 192 : index
    %c0_56 = arith.constant 0 : index
    %284 = vector.load %arg1[%c192, %c0_56] : memref<352x128xbf16, #tpu.memory_space<vmem>>, vector<32x128xbf16>
    %cst_57 = arith.constant dense<0.000000e+00> : vector<16x128xf32>
    %285 = tpu.matmul %283, %284, %cst_57 {dimension_numbers = #tpu.dot_dimension_numbers<[1], [0], [0], [1], [0, 0, 1, 1], [], []>} : vector<16x32xbf16>, vector<32x128xbf16>, vector<16x128xf32> -> vector<16x128xf32>
    %286 = vector.extract_strided_slice %285 {offsets = [0, 0], sizes = [16, 32], strides = [1, 1]} : vector<16x128xf32> to vector<16x32xf32>
    %287 = arith.addf %182, %286 : vector<16x32xf32>
    %288 = vector.extract_strided_slice %1 {offsets = [10, 0], sizes = [1, 32], strides = [1, 1]} : vector<17x128xf32> to vector<1x32xf32>
    %289 = vector.extract_strided_slice %1 {offsets = [11, 0], sizes = [1, 32], strides = [1, 1]} : vector<17x128xf32> to vector<1x32xf32>
    %cst_58 = arith.constant dense<0.000000e+00> : vector<16xf32>
    %290 = vector.multi_reduction <add>, %287, %cst_58 [1] : vector<16x32xf32> to vector<16xf32>
    %291 = vector.shape_cast %290 : vector<16xf32> to vector<16x1xf32>
    %cst_59 = arith.constant 3.200000e+01 : f32
    %292 = vector.broadcast %cst_59 : f32 to vector<16x1xf32>
    %293 = arith.divf %291, %292 : vector<16x1xf32>
    %294 = vector.broadcast %293 : vector<16x1xf32> to vector<16x32xf32>
    %295 = arith.subf %287, %294 : vector<16x32xf32>
    %296 = arith.mulf %295, %295 : vector<16x32xf32>
    %cst_60 = arith.constant dense<0.000000e+00> : vector<16xf32>
    %297 = vector.multi_reduction <add>, %296, %cst_60 [1] : vector<16x32xf32> to vector<16xf32>
    %298 = vector.shape_cast %297 : vector<16xf32> to vector<16x1xf32>
    %cst_61 = arith.constant 3.200000e+01 : f32
    %299 = vector.broadcast %cst_61 : f32 to vector<16x1xf32>
    %300 = arith.divf %298, %299 : vector<16x1xf32>
    %301 = vector.broadcast %293 : vector<16x1xf32> to vector<16x32xf32>
    %302 = arith.subf %287, %301 : vector<16x32xf32>
    %cst_62 = arith.constant 9.99999974E-6 : f32
    %303 = vector.broadcast %cst_62 : f32 to vector<16x1xf32>
    %304 = arith.addf %300, %303 : vector<16x1xf32>
    %305 = math.rsqrt %304 : vector<16x1xf32>
    %306 = vector.broadcast %305 : vector<16x1xf32> to vector<16x32xf32>
    %307 = arith.mulf %302, %306 : vector<16x32xf32>
    %308 = vector.broadcast %288 : vector<1x32xf32> to vector<16x32xf32>
    %309 = arith.mulf %307, %308 : vector<16x32xf32>
    %310 = vector.broadcast %289 : vector<1x32xf32> to vector<16x32xf32>
    %311 = arith.addf %309, %310 : vector<16x32xf32>
    %312 = arith.truncf %311 : vector<16x32xf32> to vector<16x32xbf16>
    %c224 = arith.constant 224 : index
    %c0_63 = arith.constant 0 : index
    %313 = vector.load %arg1[%c224, %c0_63] : memref<352x128xbf16, #tpu.memory_space<vmem>>, vector<32x128xbf16>
    %cst_64 = arith.constant dense<0.000000e+00> : vector<16x128xf32>
    %314 = tpu.matmul %312, %313, %cst_64 {dimension_numbers = #tpu.dot_dimension_numbers<[1], [0], [0], [1], [0, 0, 1, 1], [], []>} : vector<16x32xbf16>, vector<32x128xbf16>, vector<16x128xf32> -> vector<16x128xf32>
    %315 = vector.extract_strided_slice %314 {offsets = [0, 0], sizes = [16, 64], strides = [1, 1]} : vector<16x128xf32> to vector<16x64xf32>
    %316 = vector.extract_strided_slice %1 {offsets = [12, 0], sizes = [1, 64], strides = [1, 1]} : vector<17x128xf32> to vector<1x64xf32>
    %317 = vector.broadcast %316 : vector<1x64xf32> to vector<16x64xf32>
    %318 = arith.addf %315, %317 : vector<16x64xf32>
    %cst_65 = arith.constant 0.000000e+00 : f32
    %319 = vector.broadcast %cst_65 : f32 to vector<16x64xf32>
    %320 = arith.maximumf %318, %319 : vector<16x64xf32>
    %321 = arith.truncf %320 : vector<16x64xf32> to vector<16x64xbf16>
    %c256 = arith.constant 256 : index
    %c0_66 = arith.constant 0 : index
    %322 = vector.load %arg1[%c256, %c0_66] : memref<352x128xbf16, #tpu.memory_space<vmem>>, vector<64x128xbf16>
    %cst_67 = arith.constant dense<0.000000e+00> : vector<16x128xf32>
    %323 = tpu.matmul %321, %322, %cst_67 {dimension_numbers = #tpu.dot_dimension_numbers<[1], [0], [0], [1], [0, 0, 1, 1], [], []>} : vector<16x64xbf16>, vector<64x128xbf16>, vector<16x128xf32> -> vector<16x128xf32>
    %324 = vector.extract_strided_slice %323 {offsets = [0, 0], sizes = [16, 32], strides = [1, 1]} : vector<16x128xf32> to vector<16x32xf32>
    %325 = vector.extract_strided_slice %1 {offsets = [13, 0], sizes = [1, 32], strides = [1, 1]} : vector<17x128xf32> to vector<1x32xf32>
    %326 = vector.broadcast %325 : vector<1x32xf32> to vector<16x32xf32>
    %327 = arith.addf %324, %326 : vector<16x32xf32>
    %328 = arith.addf %311, %327 : vector<16x32xf32>
    %329 = vector.extract_strided_slice %1 {offsets = [14, 0], sizes = [1, 32], strides = [1, 1]} : vector<17x128xf32> to vector<1x32xf32>
    %330 = vector.extract_strided_slice %1 {offsets = [15, 0], sizes = [1, 32], strides = [1, 1]} : vector<17x128xf32> to vector<1x32xf32>
    %cst_68 = arith.constant dense<0.000000e+00> : vector<16xf32>
    %331 = vector.multi_reduction <add>, %328, %cst_68 [1] : vector<16x32xf32> to vector<16xf32>
    %332 = vector.shape_cast %331 : vector<16xf32> to vector<16x1xf32>
    %cst_69 = arith.constant 3.200000e+01 : f32
    %333 = vector.broadcast %cst_69 : f32 to vector<16x1xf32>
    %334 = arith.divf %332, %333 : vector<16x1xf32>
    %335 = vector.broadcast %334 : vector<16x1xf32> to vector<16x32xf32>
    %336 = arith.subf %328, %335 : vector<16x32xf32>
    %337 = arith.mulf %336, %336 : vector<16x32xf32>
    %cst_70 = arith.constant dense<0.000000e+00> : vector<16xf32>
    %338 = vector.multi_reduction <add>, %337, %cst_70 [1] : vector<16x32xf32> to vector<16xf32>
    %339 = vector.shape_cast %338 : vector<16xf32> to vector<16x1xf32>
    %cst_71 = arith.constant 3.200000e+01 : f32
    %340 = vector.broadcast %cst_71 : f32 to vector<16x1xf32>
    %341 = arith.divf %339, %340 : vector<16x1xf32>
    %342 = vector.broadcast %334 : vector<16x1xf32> to vector<16x32xf32>
    %343 = arith.subf %328, %342 : vector<16x32xf32>
    %cst_72 = arith.constant 9.99999974E-6 : f32
    %344 = vector.broadcast %cst_72 : f32 to vector<16x1xf32>
    %345 = arith.addf %341, %344 : vector<16x1xf32>
    %346 = math.rsqrt %345 : vector<16x1xf32>
    %347 = vector.broadcast %346 : vector<16x1xf32> to vector<16x32xf32>
    %348 = arith.mulf %343, %347 : vector<16x32xf32>
    %349 = vector.broadcast %329 : vector<1x32xf32> to vector<16x32xf32>
    %350 = arith.mulf %348, %349 : vector<16x32xf32>
    %351 = vector.broadcast %330 : vector<1x32xf32> to vector<16x32xf32>
    %352 = arith.addf %350, %351 : vector<16x32xf32>
    %353 = arith.truncf %352 : vector<16x32xf32> to vector<16x32xbf16>
    %c320 = arith.constant 320 : index
    %c0_73 = arith.constant 0 : index
    %354 = vector.load %arg1[%c320, %c0_73] : memref<352x128xbf16, #tpu.memory_space<vmem>>, vector<32x128xbf16>
    %cst_74 = arith.constant dense<0.000000e+00> : vector<16x128xf32>
    %355 = tpu.matmul %353, %354, %cst_74 {dimension_numbers = #tpu.dot_dimension_numbers<[1], [0], [0], [1], [0, 0, 1, 1], [], []>} : vector<16x32xbf16>, vector<32x128xbf16>, vector<16x128xf32> -> vector<16x128xf32>
    %356 = vector.extract_strided_slice %1 {offsets = [16, 0], sizes = [1, 128], strides = [1, 1]} : vector<17x128xf32> to vector<1x128xf32>
    %357 = vector.broadcast %356 : vector<1x128xf32> to vector<16x128xf32>
    %358 = arith.addf %355, %357 : vector<16x128xf32>
    %c0_75 = arith.constant 0 : index
    %c0_76 = arith.constant 0 : index
    %359 = vector.load %arg5[%c0_75, %c0_76] : memref<16x128xf32, #tpu.memory_space<vmem>>, vector<16x128xf32>
    tpu.vector_store %arg5[%c0_75, %c0_76], %358 {strides = array<i32>} : memref<16x128xf32, #tpu.memory_space<vmem>>, vector<16x128xf32>,
    return
  }
}

</mosaic_0001>

<llo_original>
// kernel: music_transformer_xl.1
$region0: #{music_transformer_xl.1}
  #allocation0 [shape = 'u32[]', space=smem, size = 0x4, offset = 0x4, fixed_abs, tag = 'smem constant byte address 0x4 - core index']
  #allocation1 [shape = 'u32[72,128]{1,0:T(1,128)}', space=vmem, size = 0x9000, scoped, tag = 'internal scratch']
  %s0 = inlined_call_operand.vmem [shape: f32[16,32], index: 0, kind: input, shape index: {}]
  %s1 = inlined_call_operand.vmem [shape: bf16[352,128], index: 1, kind: input, shape index: {}]
  %s2 = inlined_call_operand.vmem [shape: f32[17,128], index: 2, kind: input, shape index: {}]
  %s3 = inlined_call_operand.vmem [shape: bf16[2,32,16], index: 3, kind: input, shape index: {}]
  %s4 = inlined_call_operand.vmem [shape: f32[16,19], index: 4, kind: input, shape index: {}]
  %s5 = inlined_call_operand.vmem [shape: f32[16,128], index: 5, kind: output, shape index: {}]
  %s6 = sld [smem:[#allocation0]]
  $region30: #{music_transformer_xl.1} parent=0
    _
  %s8 = ssub.s32 1, %s6
  %s9 = scalar_select 0, %s8, %s6
  // Predicated region
  $region2: #{music_transformer_xl.1} parent=0 // pred_check
    _
  $region3: #{music_transformer_xl.1} parent=0 // pred_check_branch
    %11 = sbr.rel (0) target = $region5
  $region4: #{music_transformer_xl.1} parent=0 // pred_region
    _
  $region5: #{music_transformer_xl.1} parent=0 // pred_fallthru
    _
  // Predicated region
  $region6: #{music_transformer_xl.1} parent=0 // pred_check
    _
  $region7: #{music_transformer_xl.1} parent=0 // pred_check_branch
    %13 = sbr.rel (0) target = $region9
  $region8: #{music_transformer_xl.1} parent=0 // pred_region
    _
  $region9: #{music_transformer_xl.1} parent=0 // pred_fallthru
    _
  // Predicated region
  $region10: #{music_transformer_xl.1} parent=0 // pred_check
    _
  $region11: #{music_transformer_xl.1} parent=0 // pred_check_branch
    %15 = sbr.rel (0) target = $region13
  $region12: #{music_transformer_xl.1} parent=0 // pred_region
    _
  $region13: #{music_transformer_xl.1} parent=0 // pred_fallthru
    _
  // Predicated region
  $region14: #{music_transformer_xl.1} parent=0 // pred_check
    _
  $region15: #{music_transformer_xl.1} parent=0 // pred_check_branch
    %17 = sbr.rel (0) target = $region17
  $region16: #{music_transformer_xl.1} parent=0 // pred_region
    _
  $region17: #{music_transformer_xl.1} parent=0 // pred_fallthru
    _
  // Predicated region
  $region18: #{music_transformer_xl.1} parent=0 // pred_check
    _
  $region19: #{music_transformer_xl.1} parent=0 // pred_check_branch
    %19 = sbr.rel (0) target = $region21
  $region20: #{music_transformer_xl.1} parent=0 // pred_region
    _
  $region21: #{music_transformer_xl.1} parent=0 // pred_fallthru
    _
  %v21 = vld [vmem:[%s0] sm:$0xff]
  %v22 = vld [vmem:[%s0 + $0x8] sm:$0xff]
  %v23 = vld [vmem:[%s2] sm:$0xff]
  %v24 = vld [vmem:[%s2 + $0x8] sm:$0xff]
  %v25 = vld [vmem:[%s2 + $0x10] sm:$0x1]
  %v26 = vld [vmem:[%s4] sm:$0xff]
  %v27 = vld [vmem:[%s4 + $0x8] sm:$0xff]
  %vm28 = vcmp.gt.f32.partialorder %v26, 0.5
  %vm29 = vcmp.gt.f32.partialorder %v27, 0.5
  %v30 = vpack.c.bf16 %v22, %v21
  %v31 = vld [vmem:[%s1] sm:$0xf]
  %v32 = vld [vmem:[%s1 + $0x4] sm:$0xf]
  %v33 = vld [vmem:[%s1 + $0x8] sm:$0xf]
  %v34 = vld [vmem:[%s1 + $0xc] sm:$0xf]
  %v39 = vunpack.c.l.b16 %v31
  %v40 = vunpack.c.l.b16 %v32
  %v41 = vunpack.c.l.b16 %v33
  %v42 = vunpack.c.l.b16 %v34
  %v43 = vpack.c.b16 %v40, %v39
  %v44 = vpack.c.b16 %v42, %v41
  %vm47 = vcmask 261120
  %v49 = vsel %vm47, %v30, 0
  %51 = vmatpush.bf16.msra.mxu0 0
  %52 = vmatpush.bf16.msra.mxu0 0
  %53 = vmatpush.bf16.msra.mxu0 0
  %54 = vmatpush.bf16.msra.mxu0 0
  %55 = vmatpush.bf16.msra.mxu0 0
  %56 = vmatpush.bf16.msra.mxu0 0
  %57 = vmatpush.bf16.msra.mxu0 %v44
  %58 = vmatpush.bf16.msra.mxu0 %v43
  %59 = vmatmul.bf16.gmra.mxu0 %v49
  %v60 = vpop.f32.mrf.mxu0
  %v61 = vadd.f32 0.0, %v60
  %v62 = vpop.f32.mrf.mxu0
  %v63 = vadd.f32 0.0, %v62
  %64 = vdwg.mxu0
  %v65 = vpack.c.bf16 %v61, %v61
  %v66 = vpack.c.bf16 %v63, %v63
  %v67 = vperm.slane %v23, 0
  %v68 = vadd.f32 %v61, %v67
  %v69 = vadd.f32 %v63, %v67
  %v70 = vpack.c.bf16 %v68, %v68
  %v71 = vpack.c.bf16 %v69, %v69
  %v72 = vperm.slane %v23, 1
  %v73 = vadd.f32 %v61, %v72
  %v74 = vadd.f32 %v63, %v72
  %v75 = vpack.c.bf16 %v74, %v73
  %v76 = vld [vmem:[%s3] sm:$0xf]
  %v77 = vld [vmem:[%s3 + $0x4] sm:$0xf]
  %v78 = vld [vmem:[%s3 + $0x8] sm:$0xf]
  %v79 = vld [vmem:[%s3 + $0xc] sm:$0xf]
  %v84 = vunpack.c.l.b16 %v76
  %v85 = vunpack.c.l.b16 %v77
  %v86 = vunpack.c.l.b16 %v78
  %v87 = vunpack.c.l.b16 %v79
  %v88 = vpack.c.b16 %v85, %v84
  %v89 = vpack.c.b16 %v87, %v86
  %v93 = vsel %vm47, %v75, 0
  %95 = vmatpush.bf16.msra.mxu0 0
  %96 = vmatpush.bf16.msra.mxu0 0
  %97 = vmatpush.bf16.msra.mxu0 0
  %98 = vmatpush.bf16.msra.mxu0 0
  %99 = vmatpush.bf16.msra.mxu0 0
  %100 = vmatpush.bf16.msra.mxu0 0
  %101 = vmatpush.bf16.msra.mxu0 %v89
  %102 = vmatpush.bf16.msra.mxu0 %v88
  %103 = vmatmul.bf16.gmra.mxu0 %v93
  %v104 = vpop.f32.mrf.mxu0
  %v105 = vadd.f32 0.0, %v104
  %v106 = vpop.f32.mrf.mxu0
  %v107 = vadd.f32 0.0, %v106
  %108 = vdwg.mxu0
  %111 = vrot.lane.b32.xlu0 %v105, 121
  %v112 = vpop.permute.xlu0 %111
  %113 = vrot.lane.b32.xlu0 %v107, 121
  %v114 = vpop.permute.xlu0 %113
  %117 = vrot.lane.b32.xlu0 %v105, 1
  %v118 = vpop.permute.xlu0 %117
  %119 = vrot.lane.b32.xlu0 %v107, 1
  %v120 = vpop.permute.xlu0 %119
  %vm123 = vcmask 7168
  %v124 = vsel %vm123, %v112, %v118
  %v125 = vsel %vm123, %v114, %v120
  %v126 = vsel %vm28, 1, 0
  %v127 = vsel %vm29, 1, 0
  %128 = vset.pattern.permute.xlu0 16
  %129 = vperm.xlu0 %128, %v126
  %v130 = vpop.permute.xlu0 %129
  %131 = vset.pattern.permute.xlu0 16
  %132 = vperm.xlu0 %131, %v127
  %v133 = vpop.permute.xlu0 %132
  %vm134 = vcmp.eq.s32.totalorder %v130, 1
  %vm135 = vcmp.eq.s32.totalorder %v133, 1
  %v136 = vsel %vm134, %v124, %v105
  %v137 = vsel %vm135, %v125, %v107
  %140 = vrot.lane.b32.xlu0 %v136, 122
  %v141 = vpop.permute.xlu0 %140
  %142 = vrot.lane.b32.xlu0 %v137, 122
  %v143 = vpop.permute.xlu0 %142
  %146 = vrot.lane.b32.xlu0 %v136, 2
  %v147 = vpop.permute.xlu0 %146
  %148 = vrot.lane.b32.xlu0 %v137, 2
  %v149 = vpop.permute.xlu0 %148
  %vm152 = vcmask 15360
  %v153 = vsel %vm152, %v141, %v147
  %v154 = vsel %vm152, %v143, %v149
  %155 = vset.pattern.permute.xlu0 17
  %156 = vperm.xlu0 %155, %v126
  %v157 = vpop.permute.xlu0 %156
  %158 = vset.pattern.permute.xlu0 17
  %159 = vperm.xlu0 %158, %v127
  %v160 = vpop.permute.xlu0 %159
  %vm161 = vcmp.eq.s32.totalorder %v157, 1
  %vm162 = vcmp.eq.s32.totalorder %v160, 1
  %v163 = vsel %vm161, %v153, %v136
  %v164 = vsel %vm162, %v154, %v137
  %167 = vrot.lane.b32.xlu0 %v163, 124
  %v168 = vpop.permute.xlu0 %167
  %169 = vrot.lane.b32.xlu0 %v164, 124
  %v170 = vpop.permute.xlu0 %169
  %173 = vrot.lane.b32.xlu0 %v163, 4
  %v174 = vpop.permute.xlu0 %173
  %175 = vrot.lane.b32.xlu0 %v164, 4
  %v176 = vpop.permute.xlu0 %175
  %vm179 = vcmask 31744
  %v180 = vsel %vm179, %v168, %v174
  %v181 = vsel %vm179, %v170, %v176
  %182 = vset.pattern.permute.xlu0 18
  %183 = vperm.xlu0 %182, %v126
  %v184 = vpop.permute.xlu0 %183
  %185 = vset.pattern.permute.xlu0 18
  %186 = vperm.xlu0 %185, %v127
  %v187 = vpop.permute.xlu0 %186
  %vm188 = vcmp.eq.s32.totalorder %v184, 1
  %vm189 = vcmp.eq.s32.totalorder %v187, 1
  %v190 = vsel %vm188, %v180, %v163
  %v191 = vsel %vm189, %v181, %v164
  %194 = vrot.lane.b32.xlu0 %v190, 8
  %v195 = vpop.permute.xlu0 %194
  %196 = vrot.lane.b32.xlu0 %v191, 8
  %v197 = vpop.permute.xlu0 %196
  %vm200 = vcmask 64512
  %v201 = vsel %vm200, %v190, %v195
  %v202 = vsel %vm200, %v191, %v197
  %v205 = vunpack.c.l.b16 %v70
  %v206 = vunpack.c.l.b16 %v71
  %v207 = vpack.c.b16 %v206, %v205
  %v210 = vunpack.c.l.b16 %v65
  %v211 = vunpack.c.l.b16 %v66
  %v212 = vpack.c.b16 %v211, %v210
  %213 = vrot.lane.b32.xlu0 %v212, 96
  %v214 = vpop.permute.xlu0 %213
  %vm215 = vcmask 130048
  %v217 = vsel %vm215, %v207, 0
  %v220 = vsel %vm215, %v214, 0
  %222 = vmatpush.bf16.xpose.msra.mxu0 0
  %223 = vmatpush.bf16.xpose.msra.mxu0 0
  %224 = vmatpush.bf16.xpose.msra.mxu0 0
  %225 = vmatpush.bf16.xpose.msra.mxu0 0
  %226 = vmatpush.bf16.xpose.msra.mxu0 0
  %227 = vmatpush.bf16.xpose.msra.mxu0 0
  %228 = vmatpush.bf16.xpose.msra.mxu0 0
  %229 = vmatpush.bf16.xpose.msra.mxu0 %v220
  %230 = vmatmul.bf16.gmra.mxu0 %v217
  %v231 = vpop.f32.mrf.mxu0
  %v232 = vadd.f32 %v201, %v231
  %v233 = vpop.f32.mrf.mxu0
  %v234 = vadd.f32 %v202, %v233
  %235 = vdwg.mxu0
  %v236 = vmul.f32 %v232, 0.25
  %v237 = vmul.f32 %v234, 0.25
  %v238 = vadd.f32 %v236, %v26
  %v239 = vadd.f32 %v237, %v27
  %v240 = vsel %vm215, %v238, -inf
  %241 = vmax.xlane.f32.xlu0 %v240
  %v242 = vpop.xlane.xlu0 %241
  %v243 = vsel %vm215, %v239, -inf
  %244 = vmax.xlane.f32.xlu0 %v243
  %v245 = vpop.xlane.xlu0 %244
  %v246 = vsub.f32 %v238, %v242
  %v247 = vsub.f32 %v239, %v245
  %v248 = vmul.f32 %v246, 1.442695
  %v249 = vpow.pop %v248
  %v250 = vmul.f32 %v247, 1.442695
  %v251 = vpow.pop %v250
  %v252 = vsel %vm215, %v249, 0.0
  %253 = vadd.xlane.f32.xlu0 %v252
  %v254 = vpop.xlane.xlu0 %253
  %v255 = vsel %vm215, %v251, 0.0
  %256 = vadd.xlane.f32.xlu0 %v255
  %v257 = vpop.xlane.xlu0 %256
  %v258 = vrcp.pop %v254
  %v259 = vrcp.pop %v257
  %v260 = vmul.f32 %v249, %v258
  %v261 = vmul.f32 %v251, %v259
  %v262 = vpack.c.bf16 %v261, %v260
  %263 = vrot.lane.b32.xlu0 %v212, 64
  %v264 = vpop.permute.xlu0 %263
  %v267 = vsel %vm215, %v262, 0
  %269 = vmatpush.bf16.msra.mxu0 0
  %270 = vmatpush.bf16.msra.mxu0 0
  %271 = vmatpush.bf16.msra.mxu0 0
  %272 = vmatpush.bf16.msra.mxu0 0
  %273 = vmatpush.bf16.msra.mxu0 0
  %274 = vmatpush.bf16.msra.mxu0 0
  %275 = vmatpush.bf16.msra.mxu0 0
  %276 = vmatpush.bf16.msra.mxu0 %v264
  %277 = vmatmul.bf16.gmra.mxu0 %v267
  %v278 = vpop.f32.mrf.mxu0
  %v279 = vadd.f32 0.0, %v278
  %v280 = vpop.f32.mrf.mxu0
  %v281 = vadd.f32 0.0, %v280
  %282 = vdwg.mxu0
  %283 = vrot.lane.b32.xlu0 %v105, 113
  %v284 = vpop.permute.xlu0 %283
  %285 = vrot.lane.b32.xlu0 %v107, 113
  %v286 = vpop.permute.xlu0 %285
  %v289 = vsel %vm123, %v284, %v112
  %v290 = vsel %vm123, %v286, %v114
  %291 = vrot.lane.b32.xlu0 %v105, 120
  %v292 = vpop.permute.xlu0 %291
  %293 = vrot.lane.b32.xlu0 %v107, 120
  %v294 = vpop.permute.xlu0 %293
  %v297 = vsel %vm134, %v289, %v292
  %v298 = vsel %vm135, %v290, %v294
  %301 = vrot.lane.b32.xlu0 %v297, 122
  %v302 = vpop.permute.xlu0 %301
  %303 = vrot.lane.b32.xlu0 %v298, 122
  %v304 = vpop.permute.xlu0 %303
  %307 = vrot.lane.b32.xlu0 %v297, 2
  %v308 = vpop.permute.xlu0 %307
  %309 = vrot.lane.b32.xlu0 %v298, 2
  %v310 = vpop.permute.xlu0 %309
  %v313 = vsel %vm152, %v302, %v308
  %v314 = vsel %vm152, %v304, %v310
  %v315 = vsel %vm161, %v313, %v297
  %v316 = vsel %vm162, %v314, %v298
  %319 = vrot.lane.b32.xlu0 %v315, 124
  %v320 = vpop.permute.xlu0 %319
  %321 = vrot.lane.b32.xlu0 %v316, 124
  %v322 = vpop.permute.xlu0 %321
  %325 = vrot.lane.b32.xlu0 %v315, 4
  %v326 = vpop.permute.xlu0 %325
  %327 = vrot.lane.b32.xlu0 %v316, 4
  %v328 = vpop.permute.xlu0 %327
  %v331 = vsel %vm179, %v320, %v326
  %v332 = vsel %vm179, %v322, %v328
  %v333 = vsel %vm188, %v331, %v315
  %v334 = vsel %vm189, %v332, %v316
  %337 = vrot.lane.b32.xlu0 %v333, 8
  %v338 = vpop.permute.xlu0 %337
  %339 = vrot.lane.b32.xlu0 %v334, 8
  %v340 = vpop.permute.xlu0 %339
  %v343 = vsel %vm200, %v333, %v338
  %v344 = vsel %vm200, %v334, %v340
  %345 = vrot.lane.b32.xlu0 %v207, 112
  %v346 = vpop.permute.xlu0 %345
  %347 = vrot.lane.b32.xlu0 %v212, 80
  %v348 = vpop.permute.xlu0 %347
  %v350 = vsel %vm215, %v346, 0
  %v353 = vsel %vm215, %v348, 0
  %355 = vmatpush.bf16.xpose.msra.mxu0 0
  %356 = vmatpush.bf16.xpose.msra.mxu0 0
  %357 = vmatpush.bf16.xpose.msra.mxu0 0
  %358 = vmatpush.bf16.xpose.msra.mxu0 0
  %359 = vmatpush.bf16.xpose.msra.mxu0 0
  %360 = vmatpush.bf16.xpose.msra.mxu0 0
  %361 = vmatpush.bf16.xpose.msra.mxu0 0
  %362 = vmatpush.bf16.xpose.msra.mxu0 %v353
  %363 = vmatmul.bf16.gmra.mxu0 %v350
  %v364 = vpop.f32.mrf.mxu0
  %v365 = vadd.f32 %v343, %v364
  %v366 = vpop.f32.mrf.mxu0
  %v367 = vadd.f32 %v344, %v366
  %368 = vdwg.mxu0
  %v369 = vmul.f32 %v365, 0.25
  %v370 = vmul.f32 %v367, 0.25
  %v371 = vadd.f32 %v369, %v26
  %v372 = vadd.f32 %v370, %v27
  %v373 = vsel %vm215, %v371, -inf
  %374 = vmax.xlane.f32.xlu0 %v373
  %v375 = vpop.xlane.xlu0 %374
  %v376 = vsel %vm215, %v372, -inf
  %377 = vmax.xlane.f32.xlu0 %v376
  %v378 = vpop.xlane.xlu0 %377
  %v379 = vsub.f32 %v371, %v375
  %v380 = vsub.f32 %v372, %v378
  %v381 = vmul.f32 %v379, 1.442695
  %v382 = vpow.pop %v381
  %v383 = vmul.f32 %v380, 1.442695
  %v384 = vpow.pop %v383
  %v385 = vsel %vm215, %v382, 0.0
  %386 = vadd.xlane.f32.xlu0 %v385
  %v387 = vpop.xlane.xlu0 %386
  %v388 = vsel %vm215, %v384, 0.0
  %389 = vadd.xlane.f32.xlu0 %v388
  %v390 = vpop.xlane.xlu0 %389
  %v391 = vrcp.pop %v387
  %v392 = vrcp.pop %v390
  %v393 = vmul.f32 %v382, %v391
  %v394 = vmul.f32 %v384, %v392
  %v395 = vpack.c.bf16 %v394, %v393
  %396 = vrot.lane.b32.xlu0 %v212, 48
  %v397 = vpop.permute.xlu0 %396
  %v400 = vsel %vm215, %v395, 0
  %402 = vmatpush.bf16.msra.mxu0 0
  %403 = vmatpush.bf16.msra.mxu0 0
  %404 = vmatpush.bf16.msra.mxu0 0
  %405 = vmatpush.bf16.msra.mxu0 0
  %406 = vmatpush.bf16.msra.mxu0 0
  %407 = vmatpush.bf16.msra.mxu0 0
  %408 = vmatpush.bf16.msra.mxu0 0
  %409 = vmatpush.bf16.msra.mxu0 %v397
  %410 = vmatmul.bf16.gmra.mxu0 %v400
  %v411 = vpop.f32.mrf.mxu0
  %v412 = vadd.f32 0.0, %v411
  %v413 = vpop.f32.mrf.mxu0
  %v414 = vadd.f32 0.0, %v413
  %415 = vdwg.mxu0
  %418 = vrot.lane.b32.xlu0 %v412, 16
  %v419 = vpop.permute.xlu0 %418
  %420 = vrot.lane.b32.xlu0 %v414, 16
  %v421 = vpop.permute.xlu0 %420
  %v424 = vsel %vm215, %v279, %v419
  %v425 = vsel %vm215, %v281, %v421
  %v426 = vpack.c.bf16 %v425, %v424
  %v427 = vld [vmem:[%s1 + $0x10] sm:$0xf]
  %v428 = vld [vmem:[%s1 + $0x14] sm:$0xf]
  %v429 = vld [vmem:[%s1 + $0x18] sm:$0xf]
  %v430 = vld [vmem:[%s1 + $0x1c] sm:$0xf]
  %v435 = vunpack.c.l.b16 %v427
  %v436 = vunpack.c.l.b16 %v428
  %v437 = vunpack.c.l.b16 %v429
  %v438 = vunpack.c.l.b16 %v430
  %v439 = vpack.c.b16 %v436, %v435
  %v440 = vpack.c.b16 %v438, %v437
  %v444 = vsel %vm47, %v426, 0
  %446 = vmatpush.bf16.msra.mxu0 0
  %447 = vmatpush.bf16.msra.mxu0 0
  %448 = vmatpush.bf16.msra.mxu0 0
  %449 = vmatpush.bf16.msra.mxu0 0
  %450 = vmatpush.bf16.msra.mxu0 0
  %451 = vmatpush.bf16.msra.mxu0 0
  %452 = vmatpush.bf16.msra.mxu0 %v440
  %453 = vmatpush.bf16.msra.mxu0 %v439
  %454 = vmatmul.bf16.gmra.mxu0 %v444
  %v455 = vpop.f32.mrf.mxu0
  %v456 = vadd.f32 0.0, %v455
  %v457 = vpop.f32.mrf.mxu0
  %v458 = vadd.f32 0.0, %v457
  %459 = vdwg.mxu0
  %v460 = vadd.f32 %v21, %v456
  %v461 = vadd.f32 %v22, %v458
  %v462 = vsel %vm47, %v460, 0.0
  %463 = vadd.xlane.f32.xlu0 %v462
  %v464 = vpop.xlane.xlu0 %463
  %v465 = vsel %vm47, %v461, 0.0
  %466 = vadd.xlane.f32.xlu0 %v465
  %v467 = vpop.xlane.xlu0 %466
  %v468 = vrcp.pop 32.0
  %v469 = vmul.f32 32.0, %v468
  %v470 = vsub.f32 1.0, %v469
  %v471 = vmul.f32 %v468, %v470
  %v472 = vadd.f32 %v468, %v471
  %vm473 = vweird.f32 %v468
  %v474 = vsel %vm473, %v468, %v472
  %v475 = vmul.f32 %v464, %v474
  %v476 = vmul.f32 %v467, %v474
  %v477 = vsub.f32 %v460, %v475
  %v478 = vsub.f32 %v461, %v476
  %v479 = vmul.f32 %v477, %v477
  %v480 = vmul.f32 %v478, %v478
  %v481 = vsel %vm47, %v479, 0.0
  %482 = vadd.xlane.f32.xlu0 %v481
  %v483 = vpop.xlane.xlu0 %482
  %v484 = vsel %vm47, %v480, 0.0
  %485 = vadd.xlane.f32.xlu0 %v484
  %v486 = vpop.xlane.xlu0 %485
  %v487 = vmul.f32 %v483, %v474
  %v488 = vmul.f32 %v486, %v474
  %v489 = vadd.f32 %v487, 1e-05
  %v490 = vadd.f32 %v488, 1e-05
  %v491 = vrsqrt.pop %v489
  %v492 = vmul.f32 %v491, %v489
  %v493 = vmul.f32 %v492, %v491
  %v494 = vmul.f32 0.5, %v493
  %v495 = vsub.f32 1.5, %v494
  %v496 = vmul.f32 %v491, %v495
  %vm497 = vweird.f32 %v489
  %vm498 = vweird.f32 %v491
  %vm499 = vmor %vm497, %vm498
  %v500 = vsel %vm499, %v491, %v496
  %v501 = vrsqrt.pop %v490
  %v502 = vmul.f32 %v501, %v490
  %v503 = vmul.f32 %v502, %v501
  %v504 = vmul.f32 0.5, %v503
  %v505 = vsub.f32 1.5, %v504
  %v506 = vmul.f32 %v501, %v505
  %vm507 = vweird.f32 %v490
  %vm508 = vweird.f32 %v501
  %vm509 = vmor %vm507, %vm508
  %v510 = vsel %vm509, %v501, %v506
  %v511 = vmul.f32 %v477, %v500
  %v512 = vmul.f32 %v478, %v510
  %v513 = vperm.slane %v23, 2
  %v514 = vmul.f32 %v511, %v513
  %v515 = vmul.f32 %v512, %v513
  %v516 = vperm.slane %v23, 3
  %v517 = vadd.f32 %v514, %v516
  %v518 = vadd.f32 %v515, %v516
  %v519 = vpack.c.bf16 %v518, %v517
  %v520 = vld [vmem:[%s1 + $0x20] sm:$0xf]
  %v521 = vld [vmem:[%s1 + $0x24] sm:$0xf]
  %v522 = vld [vmem:[%s1 + $0x28] sm:$0xf]
  %v523 = vld [vmem:[%s1 + $0x2c] sm:$0xf]
  %v528 = vunpack.c.l.b16 %v520
  %v529 = vunpack.c.l.b16 %v521
  %v530 = vunpack.c.l.b16 %v522
  %v531 = vunpack.c.l.b16 %v523
  %v532 = vpack.c.b16 %v529, %v528
  %v533 = vpack.c.b16 %v531, %v530
  %v537 = vsel %vm47, %v519, 0
  %539 = vmatpush.bf16.msra.mxu0 0
  %540 = vmatpush.bf16.msra.mxu0 0
  %541 = vmatpush.bf16.msra.mxu0 0
  %542 = vmatpush.bf16.msra.mxu0 0
  %543 = vmatpush.bf16.msra.mxu0 0
  %544 = vmatpush.bf16.msra.mxu0 0
  %545 = vmatpush.bf16.msra.mxu0 %v533
  %546 = vmatpush.bf16.msra.mxu0 %v532
  %547 = vmatmul.bf16.gmra.mxu0 %v537
  %v548 = vpop.f32.mrf.mxu0
  %v549 = vadd.f32 0.0, %v548
  %v550 = vpop.f32.mrf.mxu0
  %v551 = vadd.f32 0.0, %v550
  %552 = vdwg.mxu0
  %v553 = vperm.slane %v23, 4
  %v554 = vadd.f32 %v549, %v553
  %v555 = vadd.f32 %v551, %v553
  %v556 = vmax.f32 %v554, 0.0
  %v557 = vmax.f32 %v555, 0.0
  %v558 = vpack.c.bf16 %v557, %v556
  %v559 = vld [vmem:[%s1 + $0x30] sm:$0xf]
  %v560 = vld [vmem:[%s1 + $0x34] sm:$0xf]
  %v561 = vld [vmem:[%s1 + $0x38] sm:$0xf]
  %v562 = vld [vmem:[%s1 + $0x3c] sm:$0xf]
  %v563 = vld [vmem:[%s1 + $0x40] sm:$0xf]
  %v564 = vld [vmem:[%s1 + $0x44] sm:$0xf]
  %v565 = vld [vmem:[%s1 + $0x48] sm:$0xf]
  %v566 = vld [vmem:[%s1 + $0x4c] sm:$0xf]
  %v575 = vunpack.c.l.b16 %v559
  %v576 = vunpack.c.l.b16 %v560
  %v577 = vunpack.c.l.b16 %v561
  %v578 = vunpack.c.l.b16 %v562
  %v579 = vunpack.c.l.b16 %v563
  %v580 = vunpack.c.l.b16 %v564
  %v581 = vunpack.c.l.b16 %v565
  %v582 = vunpack.c.l.b16 %v566
  %v583 = vpack.c.b16 %v576, %v575
  %v584 = vpack.c.b16 %v578, %v577
  %v585 = vpack.c.b16 %v580, %v579
  %v586 = vpack.c.b16 %v582, %v581
  %vm591 = vcmask 523264
  %v593 = vsel %vm591, %v558, 0
  %595 = vmatpush.bf16.msra.mxu0 0
  %596 = vmatpush.bf16.msra.mxu0 0
  %597 = vmatpush.bf16.msra.mxu0 0
  %598 = vmatpush.bf16.msra.mxu0 0
  %599 = vmatpush.bf16.msra.mxu0 %v586
  %600 = vmatpush.bf16.msra.mxu0 %v585
  %601 = vmatpush.bf16.msra.mxu0 %v584
  %602 = vmatpush.bf16.msra.mxu0 %v583
  %603 = vmatmul.bf16.gmra.mxu0 %v593
  %v604 = vpop.f32.mrf.mxu0
  %v605 = vadd.f32 0.0, %v604
  %v606 = vpop.f32.mrf.mxu0
  %v607 = vadd.f32 0.0, %v606
  %608 = vdwg.mxu0
  %v609 = vperm.slane %v23, 5
  %v610 = vadd.f32 %v605, %v609
  %v611 = vadd.f32 %v607, %v609
  %v612 = vadd.f32 %v517, %v610
  %v613 = vadd.f32 %v518, %v611
  %v614 = vsel %vm47, %v612, 0.0
  %615 = vadd.xlane.f32.xlu0 %v614
  %v616 = vpop.xlane.xlu0 %615
  %v617 = vsel %vm47, %v613, 0.0
  %618 = vadd.xlane.f32.xlu0 %v617
  %v619 = vpop.xlane.xlu0 %618
  %v620 = vmul.f32 %v616, %v474
  %v621 = vmul.f32 %v619, %v474
  %v622 = vsub.f32 %v612, %v620
  %v623 = vsub.f32 %v613, %v621
  %v624 = vmul.f32 %v622, %v622
  %v625 = vmul.f32 %v623, %v623
  %v626 = vsel %vm47, %v624, 0.0
  %627 = vadd.xlane.f32.xlu0 %v626
  %v628 = vpop.xlane.xlu0 %627
  %v629 = vsel %vm47, %v625, 0.0
  %630 = vadd.xlane.f32.xlu0 %v629
  %v631 = vpop.xlane.xlu0 %630
  %v632 = vmul.f32 %v628, %v474
  %v633 = vmul.f32 %v631, %v474
  %v634 = vadd.f32 %v632, 1e-05
  %v635 = vadd.f32 %v633, 1e-05
  %v636 = vrsqrt.pop %v634
  %v637 = vmul.f32 %v636, %v634
  %v638 = vmul.f32 %v637, %v636
  %v639 = vmul.f32 0.5, %v638
  %v640 = vsub.f32 1.5, %v639
  %v641 = vmul.f32 %v636, %v640
  %vm642 = vweird.f32 %v634
  %vm643 = vweird.f32 %v636
  %vm644 = vmor %vm642, %vm643
  %v645 = vsel %vm644, %v636, %v641
  %v646 = vrsqrt.pop %v635
  %v647 = vmul.f32 %v646, %v635
  %v648 = vmul.f32 %v647, %v646
  %v649 = vmul.f32 0.5, %v648
  %v650 = vsub.f32 1.5, %v649
  %v651 = vmul.f32 %v646, %v650
  %vm652 = vweird.f32 %v635
  %vm653 = vweird.f32 %v646
  %vm654 = vmor %vm652, %vm653
  %v655 = vsel %vm654, %v646, %v651
  %v656 = vmul.f32 %v622, %v645
  %v657 = vmul.f32 %v623, %v655
  %v658 = vperm.slane %v23, 6
  %v659 = vmul.f32 %v656, %v658
  %v660 = vmul.f32 %v657, %v658
  %v661 = vperm.slane %v23, 7
  %v662 = vadd.f32 %v659, %v661
  %v663 = vadd.f32 %v660, %v661
  %v664 = vpack.c.bf16 %v663, %v662
  %v665 = vld [vmem:[%s1 + $0x50] sm:$0xf]
  %v666 = vld [vmem:[%s1 + $0x54] sm:$0xf]
  %v667 = vld [vmem:[%s1 + $0x58] sm:$0xf]
  %v668 = vld [vmem:[%s1 + $0x5c] sm:$0xf]
  %v673 = vunpack.c.l.b16 %v665
  %v674 = vunpack.c.l.b16 %v666
  %v675 = vunpack.c.l.b16 %v667
  %v676 = vunpack.c.l.b16 %v668
  %v677 = vpack.c.b16 %v674, %v673
  %v678 = vpack.c.b16 %v676, %v675
  %v682 = vsel %vm47, %v664, 0
  %684 = vmatpush.bf16.msra.mxu0 0
  %685 = vmatpush.bf16.msra.mxu0 0
  %686 = vmatpush.bf16.msra.mxu0 0
  %687 = vmatpush.bf16.msra.mxu0 0
  %688 = vmatpush.bf16.msra.mxu0 0
  %689 = vmatpush.bf16.msra.mxu0 0
  %690 = vmatpush.bf16.msra.mxu0 %v678
  %691 = vmatpush.bf16.msra.mxu0 %v677
  %692 = vmatmul.bf16.gmra.mxu0 %v682
  %v693 = vpop.f32.mrf.mxu0
  %v694 = vadd.f32 0.0, %v693
  %v695 = vpop.f32.mrf.mxu0
  %v696 = vadd.f32 0.0, %v695
  %697 = vdwg.mxu0
  %v698 = vpack.c.bf16 %v694, %v694
  %v699 = vpack.c.bf16 %v696, %v696
  %v700 = vperm.slane %v24, 0
  %v701 = vadd.f32 %v694, %v700
  %v702 = vadd.f32 %v696, %v700
  %v703 = vpack.c.bf16 %v701, %v701
  %v704 = vpack.c.bf16 %v702, %v702
  %v705 = vperm.slane %v24, 1
  %v706 = vadd.f32 %v694, %v705
  %v707 = vadd.f32 %v696, %v705
  %v708 = vpack.c.bf16 %v707, %v706
  %s709 = scalar_lea.vmem %s3, 16
  %v710 = vld [vmem:[%s709] sm:$0xf]
  %v711 = vld [vmem:[%s709 + $0x4] sm:$0xf]
  %v712 = vld [vmem:[%s709 + $0x8] sm:$0xf]
  %v713 = vld [vmem:[%s709 + $0xc] sm:$0xf]
  %v718 = vunpack.c.l.b16 %v710
  %v719 = vunpack.c.l.b16 %v711
  %v720 = vunpack.c.l.b16 %v712
  %v721 = vunpack.c.l.b16 %v713
  %v722 = vpack.c.b16 %v719, %v718
  %v723 = vpack.c.b16 %v721, %v720
  %v727 = vsel %vm47, %v708, 0
  %729 = vmatpush.bf16.msra.mxu0 0
  %730 = vmatpush.bf16.msra.mxu0 0
  %731 = vmatpush.bf16.msra.mxu0 0
  %732 = vmatpush.bf16.msra.mxu0 0
  %733 = vmatpush.bf16.msra.mxu0 0
  %734 = vmatpush.bf16.msra.mxu0 0
  %735 = vmatpush.bf16.msra.mxu0 %v723
  %736 = vmatpush.bf16.msra.mxu0 %v722
  %737 = vmatmul.bf16.gmra.mxu0 %v727
  %v738 = vpop.f32.mrf.mxu0
  %v739 = vadd.f32 0.0, %v738
  %v740 = vpop.f32.mrf.mxu0
  %v741 = vadd.f32 0.0, %v740
  %742 = vdwg.mxu0
  %745 = vrot.lane.b32.xlu0 %v739, 121
  %v746 = vpop.permute.xlu0 %745
  %747 = vrot.lane.b32.xlu0 %v741, 121
  %v748 = vpop.permute.xlu0 %747
  %751 = vrot.lane.b32.xlu0 %v739, 1
  %v752 = vpop.permute.xlu0 %751
  %753 = vrot.lane.b32.xlu0 %v741, 1
  %v754 = vpop.permute.xlu0 %753
  %v757 = vsel %vm123, %v746, %v752
  %v758 = vsel %vm123, %v748, %v754
  %v759 = vsel %vm134, %v757, %v739
  %v760 = vsel %vm135, %v758, %v741
  %763 = vrot.lane.b32.xlu0 %v759, 122
  %v764 = vpop.permute.xlu0 %763
  %765 = vrot.lane.b32.xlu0 %v760, 122
  %v766 = vpop.permute.xlu0 %765
  %769 = vrot.lane.b32.xlu0 %v759, 2
  %v770 = vpop.permute.xlu0 %769
  %771 = vrot.lane.b32.xlu0 %v760, 2
  %v772 = vpop.permute.xlu0 %771
  %v775 = vsel %vm152, %v764, %v770
  %v776 = vsel %vm152, %v766, %v772
  %v777 = vsel %vm161, %v775, %v759
  %v778 = vsel %vm162, %v776, %v760
  %781 = vrot.lane.b32.xlu0 %v777, 124
  %v782 = vpop.permute.xlu0 %781
  %783 = vrot.lane.b32.xlu0 %v778, 124
  %v784 = vpop.permute.xlu0 %783
  %787 = vrot.lane.b32.xlu0 %v777, 4
  %v788 = vpop.permute.xlu0 %787
  %789 = vrot.lane.b32.xlu0 %v778, 4
  %v790 = vpop.permute.xlu0 %789
  %v793 = vsel %vm179, %v782, %v788
  %v794 = vsel %vm179, %v784, %v790
  %v795 = vsel %vm188, %v793, %v777
  %v796 = vsel %vm189, %v794, %v778
  %799 = vrot.lane.b32.xlu0 %v795, 8
  %v800 = vpop.permute.xlu0 %799
  %801 = vrot.lane.b32.xlu0 %v796, 8
  %v802 = vpop.permute.xlu0 %801
  %v805 = vsel %vm200, %v795, %v800
  %v806 = vsel %vm200, %v796, %v802
  %v809 = vunpack.c.l.b16 %v703
  %v810 = vunpack.c.l.b16 %v704
  %v811 = vpack.c.b16 %v810, %v809
  %v814 = vunpack.c.l.b16 %v698
  %v815 = vunpack.c.l.b16 %v699
  %v816 = vpack.c.b16 %v815, %v814
  %817 = vrot.lane.b32.xlu0 %v816, 96
  %v818 = vpop.permute.xlu0 %817
  %v820 = vsel %vm215, %v811, 0
  %v823 = vsel %vm215, %v818, 0
  %825 = vmatpush.bf16.xpose.msra.mxu0 0
  %826 = vmatpush.bf16.xpose.msra.mxu0 0
  %827 = vmatpush.bf16.xpose.msra.mxu0 0
  %828 = vmatpush.bf16.xpose.msra.mxu0 0
  %829 = vmatpush.bf16.xpose.msra.mxu0 0
  %830 = vmatpush.bf16.xpose.msra.mxu0 0
  %831 = vmatpush.bf16.xpose.msra.mxu0 0
  %832 = vmatpush.bf16.xpose.msra.mxu0 %v823
  %833 = vmatmul.bf16.gmra.mxu0 %v820
  %v834 = vpop.f32.mrf.mxu0
  %v835 = vadd.f32 %v805, %v834
  %v836 = vpop.f32.mrf.mxu0
  %v837 = vadd.f32 %v806, %v836
  %838 = vdwg.mxu0
  %v839 = vmul.f32 %v835, 0.25
  %v840 = vmul.f32 %v837, 0.25
  %v841 = vadd.f32 %v839, %v26
  %v842 = vadd.f32 %v840, %v27
  %v843 = vsel %vm215, %v841, -inf
  %844 = vmax.xlane.f32.xlu0 %v843
  %v845 = vpop.xlane.xlu0 %844
  %v846 = vsel %vm215, %v842, -inf
  %847 = vmax.xlane.f32.xlu0 %v846
  %v848 = vpop.xlane.xlu0 %847
  %v849 = vsub.f32 %v841, %v845
  %v850 = vsub.f32 %v842, %v848
  %v851 = vmul.f32 %v849, 1.442695
  %v852 = vpow.pop %v851
  %v853 = vmul.f32 %v850, 1.442695
  %v854 = vpow.pop %v853
  %v855 = vsel %vm215, %v852, 0.0
  %856 = vadd.xlane.f32.xlu0 %v855
  %v857 = vpop.xlane.xlu0 %856
  %v858 = vsel %vm215, %v854, 0.0
  %859 = vadd.xlane.f32.xlu0 %v858
  %v860 = vpop.xlane.xlu0 %859
  %v861 = vrcp.pop %v857
  %v862 = vrcp.pop %v860
  %v863 = vmul.f32 %v852, %v861
  %v864 = vmul.f32 %v854, %v862
  %v865 = vpack.c.bf16 %v864, %v863
  %866 = vrot.lane.b32.xlu0 %v816, 64
  %v867 = vpop.permute.xlu0 %866
  %v870 = vsel %vm215, %v865, 0
  %872 = vmatpush.bf16.msra.mxu0 0
  %873 = vmatpush.bf16.msra.mxu0 0
  %874 = vmatpush.bf16.msra.mxu0 0
  %875 = vmatpush.bf16.msra.mxu0 0
  %876 = vmatpush.bf16.msra.mxu0 0
  %877 = vmatpush.bf16.msra.mxu0 0
  %878 = vmatpush.bf16.msra.mxu0 0
  %879 = vmatpush.bf16.msra.mxu0 %v867
  %880 = vmatmul.bf16.gmra.mxu0 %v870
  %v881 = vpop.f32.mrf.mxu0
  %v882 = vadd.f32 0.0, %v881
  %v883 = vpop.f32.mrf.mxu0
  %v884 = vadd.f32 0.0, %v883
  %885 = vdwg.mxu0
  %886 = vrot.lane.b32.xlu0 %v739, 113
  %v887 = vpop.permute.xlu0 %886
  %888 = vrot.lane.b32.xlu0 %v741, 113
  %v889 = vpop.permute.xlu0 %888
  %v892 = vsel %vm123, %v887, %v746
  %v893 = vsel %vm123, %v889, %v748
  %894 = vrot.lane.b32.xlu0 %v739, 120
  %v895 = vpop.permute.xlu0 %894
  %896 = vrot.lane.b32.xlu0 %v741, 120
  %v897 = vpop.permute.xlu0 %896
  %v900 = vsel %vm134, %v892, %v895
  %v901 = vsel %vm135, %v893, %v897
  %904 = vrot.lane.b32.xlu0 %v900, 122
  %v905 = vpop.permute.xlu0 %904
  %906 = vrot.lane.b32.xlu0 %v901, 122
  %v907 = vpop.permute.xlu0 %906
  %910 = vrot.lane.b32.xlu0 %v900, 2
  %v911 = vpop.permute.xlu0 %910
  %912 = vrot.lane.b32.xlu0 %v901, 2
  %v913 = vpop.permute.xlu0 %912
  %v916 = vsel %vm152, %v905, %v911
  %v917 = vsel %vm152, %v907, %v913
  %v918 = vsel %vm161, %v916, %v900
  %v919 = vsel %vm162, %v917, %v901
  %922 = vrot.lane.b32.xlu0 %v918, 124
  %v923 = vpop.permute.xlu0 %922
  %924 = vrot.lane.b32.xlu0 %v919, 124
  %v925 = vpop.permute.xlu0 %924
  %928 = vrot.lane.b32.xlu0 %v918, 4
  %v929 = vpop.permute.xlu0 %928
  %930 = vrot.lane.b32.xlu0 %v919, 4
  %v931 = vpop.permute.xlu0 %930
  %v934 = vsel %vm179, %v923, %v929
  %v935 = vsel %vm179, %v925, %v931
  %v936 = vsel %vm188, %v934, %v918
  %v937 = vsel %vm189, %v935, %v919
  %940 = vrot.lane.b32.xlu0 %v936, 8
  %v941 = vpop.permute.xlu0 %940
  %942 = vrot.lane.b32.xlu0 %v937, 8
  %v943 = vpop.permute.xlu0 %942
  %v946 = vsel %vm200, %v936, %v941
  %v947 = vsel %vm200, %v937, %v943
  %948 = vrot.lane.b32.xlu0 %v811, 112
  %v949 = vpop.permute.xlu0 %948
  %950 = vrot.lane.b32.xlu0 %v816, 80
  %v951 = vpop.permute.xlu0 %950
  %v953 = vsel %vm215, %v949, 0
  %v956 = vsel %vm215, %v951, 0
  %958 = vmatpush.bf16.xpose.msra.mxu0 0
  %959 = vmatpush.bf16.xpose.msra.mxu0 0
  %960 = vmatpush.bf16.xpose.msra.mxu0 0
  %961 = vmatpush.bf16.xpose.msra.mxu0 0
  %962 = vmatpush.bf16.xpose.msra.mxu0 0
  %963 = vmatpush.bf16.xpose.msra.mxu0 0
  %964 = vmatpush.bf16.xpose.msra.mxu0 0
  %965 = vmatpush.bf16.xpose.msra.mxu0 %v956
  %966 = vmatmul.bf16.gmra.mxu0 %v953
  %v967 = vpop.f32.mrf.mxu0
  %v968 = vadd.f32 %v946, %v967
  %v969 = vpop.f32.mrf.mxu0
  %v970 = vadd.f32 %v947, %v969
  %971 = vdwg.mxu0
  %v972 = vmul.f32 %v968, 0.25
  %v973 = vmul.f32 %v970, 0.25
  %v974 = vadd.f32 %v972, %v26
  %v975 = vadd.f32 %v973, %v27
  %v976 = vsel %vm215, %v974, -inf
  %977 = vmax.xlane.f32.xlu0 %v976
  %v978 = vpop.xlane.xlu0 %977
  %v979 = vsel %vm215, %v975, -inf
  %980 = vmax.xlane.f32.xlu0 %v979
  %v981 = vpop.xlane.xlu0 %980
  %v982 = vsub.f32 %v974, %v978
  %v983 = vsub.f32 %v975, %v981
  %v984 = vmul.f32 %v982, 1.442695
  %v985 = vpow.pop %v984
  %v986 = vmul.f32 %v983, 1.442695
  %v987 = vpow.pop %v986
  %v988 = vsel %vm215, %v985, 0.0
  %989 = vadd.xlane.f32.xlu0 %v988
  %v990 = vpop.xlane.xlu0 %989
  %v991 = vsel %vm215, %v987, 0.0
  %992 = vadd.xlane.f32.xlu0 %v991
  %v993 = vpop.xlane.xlu0 %992
  %v994 = vrcp.pop %v990
  %v995 = vrcp.pop %v993
  %v996 = vmul.f32 %v985, %v994
  %v997 = vmul.f32 %v987, %v995
  %v998 = vpack.c.bf16 %v997, %v996
  %999 = vrot.lane.b32.xlu0 %v816, 48
  %v1000 = vpop.permute.xlu0 %999
  %v1003 = vsel %vm215, %v998, 0
  %1005 = vmatpush.bf16.msra.mxu0 0
  %1006 = vmatpush.bf16.msra.mxu0 0
  %1007 = vmatpush.bf16.msra.mxu0 0
  %1008 = vmatpush.bf16.msra.mxu0 0
  %1009 = vmatpush.bf16.msra.mxu0 0
  %1010 = vmatpush.bf16.msra.mxu0 0
  %1011 = vmatpush.bf16.msra.mxu0 0
  %1012 = vmatpush.bf16.msra.mxu0 %v1000
  %1013 = vmatmul.bf16.gmra.mxu0 %v1003
  %v1014 = vpop.f32.mrf.mxu0
  %v1015 = vadd.f32 0.0, %v1014
  %v1016 = vpop.f32.mrf.mxu0
  %v1017 = vadd.f32 0.0, %v1016
  %1018 = vdwg.mxu0
  %1021 = vrot.lane.b32.xlu0 %v1015, 16
  %v1022 = vpop.permute.xlu0 %1021
  %1023 = vrot.lane.b32.xlu0 %v1017, 16
  %v1024 = vpop.permute.xlu0 %1023
  %v1027 = vsel %vm215, %v882, %v1022
  %v1028 = vsel %vm215, %v884, %v1024
  %v1029 = vpack.c.bf16 %v1028, %v1027
  %v1030 = vld [vmem:[%s1 + $0x60] sm:$0xf]
  %v1031 = vld [vmem:[%s1 + $0x64] sm:$0xf]
  %v1032 = vld [vmem:[%s1 + $0x68] sm:$0xf]
  %v1033 = vld [vmem:[%s1 + $0x6c] sm:$0xf]
  %v1038 = vunpack.c.l.b16 %v1030
  %v1039 = vunpack.c.l.b16 %v1031
  %v1040 = vunpack.c.l.b16 %v1032
  %v1041 = vunpack.c.l.b16 %v1033
  %v1042 = vpack.c.b16 %v1039, %v1038
  %v1043 = vpack.c.b16 %v1041, %v1040
  %v1047 = vsel %vm47, %v1029, 0
  %1049 = vmatpush.bf16.msra.mxu0 0
  %1050 = vmatpush.bf16.msra.mxu0 0
  %1051 = vmatpush.bf16.msra.mxu0 0
  %1052 = vmatpush.bf16.msra.mxu0 0
  %1053 = vmatpush.bf16.msra.mxu0 0
  %1054 = vmatpush.bf16.msra.mxu0 0
  %1055 = vmatpush.bf16.msra.mxu0 %v1043
  %1056 = vmatpush.bf16.msra.mxu0 %v1042
  %1057 = vmatmul.bf16.gmra.mxu0 %v1047
  %v1058 = vpop.f32.mrf.mxu0
  %v1059 = vadd.f32 0.0, %v1058
  %v1060 = vpop.f32.mrf.mxu0
  %v1061 = vadd.f32 0.0, %v1060
  %1062 = vdwg.mxu0
  %v1063 = vadd.f32 %v662, %v1059
  %v1064 = vadd.f32 %v663, %v1061
  %v1065 = vsel %vm47, %v1063, 0.0
  %1066 = vadd.xlane.f32.xlu0 %v1065
  %v1067 = vpop.xlane.xlu0 %1066
  %v1068 = vsel %vm47, %v1064, 0.0
  %1069 = vadd.xlane.f32.xlu0 %v1068
  %v1070 = vpop.xlane.xlu0 %1069
  %v1071 = vmul.f32 %v1067, %v474
  %v1072 = vmul.f32 %v1070, %v474
  %v1073 = vsub.f32 %v1063, %v1071
  %v1074 = vsub.f32 %v1064, %v1072
  %v1075 = vmul.f32 %v1073, %v1073
  %v1076 = vmul.f32 %v1074, %v1074
  %v1077 = vsel %vm47, %v1075, 0.0
  %1078 = vadd.xlane.f32.xlu0 %v1077
  %v1079 = vpop.xlane.xlu0 %1078
  %v1080 = vsel %vm47, %v1076, 0.0
  %1081 = vadd.xlane.f32.xlu0 %v1080
  %v1082 = vpop.xlane.xlu0 %1081
  %v1083 = vmul.f32 %v1079, %v474
  %v1084 = vmul.f32 %v1082, %v474
  %v1085 = vadd.f32 %v1083, 1e-05
  %v1086 = vadd.f32 %v1084, 1e-05
  %v1087 = vrsqrt.pop %v1085
  %v1088 = vmul.f32 %v1087, %v1085
  %v1089 = vmul.f32 %v1088, %v1087
  %v1090 = vmul.f32 0.5, %v1089
  %v1091 = vsub.f32 1.5, %v1090
  %v1092 = vmul.f32 %v1087, %v1091
  %vm1093 = vweird.f32 %v1085
  %vm1094 = vweird.f32 %v1087
  %vm1095 = vmor %vm1093, %vm1094
  %v1096 = vsel %vm1095, %v1087, %v1092
  %v1097 = vrsqrt.pop %v1086
  %v1098 = vmul.f32 %v1097, %v1086
  %v1099 = vmul.f32 %v1098, %v1097
  %v1100 = vmul.f32 0.5, %v1099
  %v1101 = vsub.f32 1.5, %v1100
  %v1102 = vmul.f32 %v1097, %v1101
  %vm1103 = vweird.f32 %v1086
  %vm1104 = vweird.f32 %v1097
  %vm1105 = vmor %vm1103, %vm1104
  %v1106 = vsel %vm1105, %v1097, %v1102
  %v1107 = vmul.f32 %v1073, %v1096
  %v1108 = vmul.f32 %v1074, %v1106
  %v1109 = vperm.slane %v24, 2
  %v1110 = vmul.f32 %v1107, %v1109
  %v1111 = vmul.f32 %v1108, %v1109
  %v1112 = vperm.slane %v24, 3
  %v1113 = vadd.f32 %v1110, %v1112
  %v1114 = vadd.f32 %v1111, %v1112
  %v1115 = vpack.c.bf16 %v1114, %v1113
  %v1116 = vld [vmem:[%s1 + $0x70] sm:$0xf]
  %v1117 = vld [vmem:[%s1 + $0x74] sm:$0xf]
  %v1118 = vld [vmem:[%s1 + $0x78] sm:$0xf]
  %v1119 = vld [vmem:[%s1 + $0x7c] sm:$0xf]
  %v1124 = vunpack.c.l.b16 %v1116
  %v1125 = vunpack.c.l.b16 %v1117
  %v1126 = vunpack.c.l.b16 %v1118
  %v1127 = vunpack.c.l.b16 %v1119
  %v1128 = vpack.c.b16 %v1125, %v1124
  %v1129 = vpack.c.b16 %v1127, %v1126
  %v1133 = vsel %vm47, %v1115, 0
  %1135 = vmatpush.bf16.msra.mxu0 0
  %1136 = vmatpush.bf16.msra.mxu0 0
  %1137 = vmatpush.bf16.msra.mxu0 0
  %1138 = vmatpush.bf16.msra.mxu0 0
  %1139 = vmatpush.bf16.msra.mxu0 0
  %1140 = vmatpush.bf16.msra.mxu0 0
  %1141 = vmatpush.bf16.msra.mxu0 %v1129
  %1142 = vmatpush.bf16.msra.mxu0 %v1128
  %1143 = vmatmul.bf16.gmra.mxu0 %v1133
  %v1144 = vpop.f32.mrf.mxu0
  %v1145 = vadd.f32 0.0, %v1144
  %v1146 = vpop.f32.mrf.mxu0
  %v1147 = vadd.f32 0.0, %v1146
  %1148 = vdwg.mxu0
  %v1149 = vperm.slane %v24, 4
  %v1150 = vadd.f32 %v1145, %v1149
  %v1151 = vadd.f32 %v1147, %v1149
  %v1152 = vmax.f32 %v1150, 0.0
  %v1153 = vmax.f32 %v1151, 0.0
  %v1154 = vpack.c.bf16 %v1153, %v1152
  %v1155 = vld [vmem:[%s1 + $0x80] sm:$0xf]
  %v1156 = vld [vmem:[%s1 + $0x84] sm:$0xf]
  %v1157 = vld [vmem:[%s1 + $0x88] sm:$0xf]
  %v1158 = vld [vmem:[%s1 + $0x8c] sm:$0xf]
  %v1159 = vld [vmem:[%s1 + $0x90] sm:$0xf]
  %v1160 = vld [vmem:[%s1 + $0x94] sm:$0xf]
  %v1161 = vld [vmem:[%s1 + $0x98] sm:$0xf]
  %v1162 = vld [vmem:[%s1 + $0x9c] sm:$0xf]
  %v1171 = vunpack.c.l.b16 %v1155
  %v1172 = vunpack.c.l.b16 %v1156
  %v1173 = vunpack.c.l.b16 %v1157
  %v1174 = vunpack.c.l.b16 %v1158
  %v1175 = vunpack.c.l.b16 %v1159
  %v1176 = vunpack.c.l.b16 %v1160
  %v1177 = vunpack.c.l.b16 %v1161
  %v1178 = vunpack.c.l.b16 %v1162
  %v1179 = vpack.c.b16 %v1172, %v1171
  %v1180 = vpack.c.b16 %v1174, %v1173
  %v1181 = vpack.c.b16 %v1176, %v1175
  %v1182 = vpack.c.b16 %v1178, %v1177
  %v1188 = vsel %vm591, %v1154, 0
  %1190 = vmatpush.bf16.msra.mxu0 0
  %1191 = vmatpush.bf16.msra.mxu0 0
  %1192 = vmatpush.bf16.msra.mxu0 0
  %1193 = vmatpush.bf16.msra.mxu0 0
  %1194 = vmatpush.bf16.msra.mxu0 %v1182
  %1195 = vmatpush.bf16.msra.mxu0 %v1181
  %1196 = vmatpush.bf16.msra.mxu0 %v1180
  %1197 = vmatpush.bf16.msra.mxu0 %v1179
  %1198 = vmatmul.bf16.gmra.mxu0 %v1188
  %v1199 = vpop.f32.mrf.mxu0
  %v1200 = vadd.f32 0.0, %v1199
  %v1201 = vpop.f32.mrf.mxu0
  %v1202 = vadd.f32 0.0, %v1201
  %1203 = vdwg.mxu0
  %v1204 = vperm.slane %v24, 5
  %v1205 = vadd.f32 %v1200, %v1204
  %v1206 = vadd.f32 %v1202, %v1204
  %v1207 = vadd.f32 %v1113, %v1205
  %v1208 = vadd.f32 %v1114, %v1206
  %v1209 = vsel %vm47, %v1207, 0.0
  %1210 = vadd.xlane.f32.xlu0 %v1209
  %v1211 = vpop.xlane.xlu0 %1210
  %v1212 = vsel %vm47, %v1208, 0.0
  %1213 = vadd.xlane.f32.xlu0 %v1212
  %v1214 = vpop.xlane.xlu0 %1213
  %v1215 = vmul.f32 %v1211, %v474
  %v1216 = vmul.f32 %v1214, %v474
  %v1217 = vsub.f32 %v1207, %v1215
  %v1218 = vsub.f32 %v1208, %v1216
  %v1219 = vmul.f32 %v1217, %v1217
  %v1220 = vmul.f32 %v1218, %v1218
  %v1221 = vsel %vm47, %v1219, 0.0
  %1222 = vadd.xlane.f32.xlu0 %v1221
  %v1223 = vpop.xlane.xlu0 %1222
  %v1224 = vsel %vm47, %v1220, 0.0
  %1225 = vadd.xlane.f32.xlu0 %v1224
  %v1226 = vpop.xlane.xlu0 %1225
  %v1227 = vmul.f32 %v1223, %v474
  %v1228 = vmul.f32 %v1226, %v474
  %v1229 = vadd.f32 %v1227, 1e-05
  %v1230 = vadd.f32 %v1228, 1e-05
  %v1231 = vrsqrt.pop %v1229
  %v1232 = vmul.f32 %v1231, %v1229
  %v1233 = vmul.f32 %v1232, %v1231
  %v1234 = vmul.f32 0.5, %v1233
  %v1235 = vsub.f32 1.5, %v1234
  %v1236 = vmul.f32 %v1231, %v1235
  %vm1237 = vweird.f32 %v1229
  %vm1238 = vweird.f32 %v1231
  %vm1239 = vmor %vm1237, %vm1238
  %v1240 = vsel %vm1239, %v1231, %v1236
  %v1241 = vrsqrt.pop %v1230
  %v1242 = vmul.f32 %v1241, %v1230
  %v1243 = vmul.f32 %v1242, %v1241
  %v1244 = vmul.f32 0.5, %v1243
  %v1245 = vsub.f32 1.5, %v1244
  %v1246 = vmul.f32 %v1241, %v1245
  %vm1247 = vweird.f32 %v1230
  %vm1248 = vweird.f32 %v1241
  %vm1249 = vmor %vm1247, %vm1248
  %v1250 = vsel %vm1249, %v1241, %v1246
  %v1251 = vmul.f32 %v1217, %v1240
  %v1252 = vmul.f32 %v1218, %v1250
  %v1253 = vperm.slane %v24, 6
  %v1254 = vmul.f32 %v1251, %v1253
  %v1255 = vmul.f32 %v1252, %v1253
  %v1256 = vperm.slane %v24, 7
  %v1257 = vadd.f32 %v1254, %v1256
  %v1258 = vadd.f32 %v1255, %v1256
  %v1259 = vpack.c.bf16 %v1258, %v1257
  %v1260 = vld [vmem:[%s1 + $0xa0] sm:$0xf]
  %v1261 = vld [vmem:[%s1 + $0xa4] sm:$0xf]
  %v1262 = vld [vmem:[%s1 + $0xa8] sm:$0xf]
  %v1263 = vld [vmem:[%s1 + $0xac] sm:$0xf]
  %v1264 = vperm.slane %v25, 0
  %v1269 = vunpack.c.l.b16 %v1260
  %v1270 = vunpack.c.l.b16 %v1261
  %v1271 = vunpack.c.l.b16 %v1262
  %v1272 = vunpack.c.l.b16 %v1263
  %v1273 = vpack.c.b16 %v1270, %v1269
  %v1274 = vpack.c.b16 %v1272, %v1271
  %v1278 = vsel %vm47, %v1259, 0
  %1280 = vmatpush.bf16.msra.mxu0 0
  %1281 = vmatpush.bf16.msra.mxu0 0
  %1282 = vmatpush.bf16.msra.mxu0 0
  %1283 = vmatpush.bf16.msra.mxu0 0
  %1284 = vmatpush.bf16.msra.mxu0 0
  %1285 = vmatpush.bf16.msra.mxu0 0
  %1286 = vmatpush.bf16.msra.mxu0 %v1274
  %1287 = vmatpush.bf16.msra.mxu0 %v1273
  %1288 = vmatmul.bf16.gmra.mxu0 %v1278
  %v1289 = vpop.f32.mrf.mxu0
  %v1290 = vadd.f32 %v1264, %v1289
  %v1291 = vpop.f32.mrf.mxu0
  %v1292 = vadd.f32 %v1264, %v1291
  %1293 = vdwg.mxu0
  %1294 = vst [vmem:[%s5] sm:$0xff] %v1290
  %1295 = vst [vmem:[%s5 + $0x8] sm:$0xff] %v1292
  // Predicated region
  $region22: #{music_transformer_xl.1} parent=0 // pred_check
    _
  $region23: #{music_transformer_xl.1} parent=0 // pred_check_branch
    %1297 = sbr.rel (0) target = $region25
  $region24: #{music_transformer_xl.1} parent=0 // pred_region
    _
  $region25: #{music_transformer_xl.1} parent=0 // pred_fallthru
    _
  // Predicated region
  $region26: #{music_transformer_xl.1} parent=0 // pred_check
    _
  $region27: #{music_transformer_xl.1} parent=0 // pred_check_branch
    %1299 = sbr.rel (0) target = $region29
  $region28: #{music_transformer_xl.1} parent=0 // pred_region
    _
  $region29: #{music_transformer_xl.1} parent=0 // pred_fallthru
    _

</llo_original>
